<compile_context>
chip_gen: v7x
topology: tpu7x:2x2x1
jax: 0.10.0
libtpu: 0.0.40
codegen_flags: <defaults>
</compile_context>

<pallas_src>
import numpy as np

import jax
import jax.numpy as jnp
from jax import lax
from jax.experimental import pallas as pl
from jax.experimental.pallas import tpu as pltpu


# ---------------------------------------------------------------------------
# Kernel factory: grid = (B, Np // TN).  The second axis streams row tiles of
# the spatial score matrix; the output block / accumulators stay resident.
# ---------------------------------------------------------------------------
def _make_kernel(*, n_valid, n_padded, tile_n, exp_dtype):
    masked = (n_valid != n_padded)

    def kernel(xcol_ref, qm_ref, k_ref, wv_ref, bv_ref, gs_ref, gc_ref,
               out_ref, acc_ref, xs_ref, gram_ref):
        n = pl.program_id(1)

        @pl.when(n == 0)
        def _init():
            acc_ref[...] = jnp.zeros_like(acc_ref)
            gram_ref[...] = jnp.zeros_like(gram_ref)

        x_col = xcol_ref[0]        # (C, TN)  f32   streamed column tile of x
        qm = qm_ref[0]             # (Cq, TN) f32   row tile of (K J^T)^T Q
        k = k_ref[0]               # (Cq, Np) f32   resident per batch

        # --- x dedup: stash tile into resident scratch, accumulate Gram ------
        off = pl.multiple_of(n * tile_n, 128)
        xs_ref[:, pl.ds(off, tile_n)] = x_col
        gram_ref[...] += lax.dot_general(
            x_col, x_col, (((1,), (1,)), ((), ())),
            preferred_element_type=jnp.float32)                       # (C, C)

        # --- spatial scores for this row tile: s = qm^T k -> (TN, Np) --------
        # NOTE: contraction depth is only Cq = C/8, so this matmul is K-starved
        # MXU filler on v6e/v7x; revisit as VPU outer-products only if the bundle
        # dump shows the MXU issue slot binding.
        s = lax.dot_general(qm, k, (((0,), (0,)), ((), ())),
                            preferred_element_type=jnp.float32)
        if masked:
            col = lax.broadcasted_iota(jnp.int32, (1, n_padded), 1)
            s = s + jnp.where(col < n_valid, 0.0, -1e30).astype(jnp.float32)

        row_max = jnp.max(s, axis=-1, keepdims=True)                  # XLU
        # bf16 exp on v6e/v7x, f32 exp on v5e; matmul operand is bf16 either way.
        e = jnp.exp((s - row_max).astype(exp_dtype)).astype(jnp.bfloat16)

        # row sums on the MXU (keeps the second N-wide reduction off the XLU)
        ones_col = jnp.ones((n_padded, 1), jnp.bfloat16)
        l = lax.dot_general(e, ones_col, (((1,), (0,)), ((), ())),
                            preferred_element_type=jnp.float32)       # (TN, 1)
        inv_l = pl.reciprocal(l, approx=True)
        if masked:
            row = n * tile_n + lax.broadcasted_iota(jnp.int32, (tile_n, 1), 0)
            inv_l = jnp.where(row < n_valid, inv_l, 0.0)

        # value projection in transposed (TN, C) layout so the softmax
        # normalization folds in with a natural (TN,1) lane broadcast.
        vt = lax.dot_general(x_col, wv_ref[...], (((0,), (1,)), ((), ())),
                             preferred_element_type=jnp.float32) + bv_ref[...]
        vt = (vt * inv_l).astype(jnp.bfloat16)                        # (TN, C)

        # w_s accumulation: acc(C, Np) += sum_n V[:,n]/l[n] * E[n,:]
        acc_ref[...] += lax.dot_general(vt, e, (((0,), (0,)), ((), ())),
                                        preferred_element_type=jnp.float32)

        # --- finalize: channel attention + fused residual epilogue -----------
        @pl.when(n == pl.num_programs(1) - 1)
        def _finalize():
            xs = xs_ref[...]                       # (C, Np) resident copy of x
            g = gram_ref[...]                      # (C, C) = X X^T
            ca = lax.dot_general(g, g, (((1,), (0,)), ((), ())),
                                 preferred_element_type=jnp.float32)
            ca = jnp.max(ca, axis=-1, keepdims=True) - ca
            ca = ca - jnp.max(ca, axis=-1, keepdims=True)
            ec = jnp.exp(ca)
            pc = ec * pl.reciprocal(jnp.sum(ec, axis=-1, keepdims=True),
                                    approx=True)
            w_c = lax.dot_general(pc, xs, (((1,), (0,)), ((), ())),
                                  preferred_element_type=jnp.float32)
            out_ref[0] = gs_ref[0] * acc_ref[...] + gc_ref[0] * w_c + 3.0 * xs

    return kernel


# ---------------------------------------------------------------------------
# XLA-side preprocessing: tiny 3-tap convs and the (Cq,Cq) affinity core.
# ---------------------------------------------------------------------------
def _im2col3(x, axis):
    pad = [(0, 0)] * 5
    pad[axis] = (1, 1)
    xp = jnp.pad(x, pad)
    size = x.shape[axis]
    taps = [lax.slice_in_dim(xp, t, t + size, axis=axis) for t in range(3)]
    return jnp.concatenate(taps, axis=1)   # tap-major channels


def _conv3tap(x, w, b, axis):
    B, C = x.shape[0], x.shape[1]
    N = x.shape[2] * x.shape[3] * x.shape[4]
    col = _im2col3(x, axis).reshape(B, 3 * C, N)
    wf = jnp.transpose(w, (0, 2, 1)).reshape(w.shape[0], 3 * C)
    out = jnp.einsum("oc,bcn->bon", wf, col, precision=lax.Precision.HIGHEST)
    return out + b[None, :, None]          # (B, Cq, N)


def _device_kind():
    try:
        return (getattr(jax.devices()[0], "device_kind", "") or "").lower()
    except Exception:
        return ""


def affinity_attention_3d(x, params, *, tile_n=None):
    B, C, H, W, D = x.shape
    N = H * W * D
    Cq = params["wq"].shape[0]

    kind = _device_kind()
    is_v5e = any(t in kind for t in ("v5 lite", "v5e", "v5lite"))
    big_vmem = is_v5e or ("v6" in kind)               # 128 MiB VMEM parts
    exp_dtype = jnp.float32 if is_v5e else jnp.bfloat16

    x_flat = x.reshape(B, C, N)

    # anisotropic conv projections (cheap, Cq = C/8 channels each)
    q = _conv3tap(x, params["wq"], params["bq"], 3)   # kernel (1,3,1), pad (0,1,0)
    k = _conv3tap(x, params["wk"], params["bk"], 2)   # kernel (3,1,1), pad (1,0,0)
    j = _conv3tap(x, params["wj"], params["bj"], 4)   # kernel (1,1,3), pad (0,0,1)

    # reassociated affinity core:  M = K J^T (Cq,Cq);  qm = M^T Q (Cq,N)
    hp = lax.Precision.HIGHEST
    m = jnp.einsum("bcn,bdn->bcd", k, j, precision=hp)
    qm = jnp.einsum("bcd,bcn->bdn", m, q, precision=hp)

    # pad the spatial axis to a lane-dense multiple of 128; padded key columns /
    # query rows are masked inside the kernel.
    n_pad = -(-N // 128) * 128
    if tile_n is None:
        tile_n = 256 if (big_vmem and n_pad % 256 == 0) else 128
    if n_pad % tile_n != 0:
        tile_n = 128
    pad = n_pad - N
    if pad:
        pw = ((0, 0), (0, 0), (0, pad))
        x_flat = jnp.pad(x_flat, pw)
        qm = jnp.pad(qm, pw)
        k = jnp.pad(k, pw)
    nt = n_pad // tile_n

    kernel = _make_kernel(n_valid=N, n_padded=n_pad, tile_n=tile_n,
                          exp_dtype=exp_dtype)

    in_specs = [
        pl.BlockSpec((1, C, tile_n), lambda b, n: (b, 0, n)),    # x column tile
        pl.BlockSpec((1, Cq, tile_n), lambda b, n: (b, 0, n)),   # qm row tile
        pl.BlockSpec((1, Cq, n_pad), lambda b, n: (b, 0, 0)),    # k (resident/batch)
        pl.BlockSpec((C, C), lambda b, n: (0, 0)),               # value conv weight
        pl.BlockSpec((1, C), lambda b, n: (0, 0)),               # value conv bias
        pl.BlockSpec(memory_space=pltpu.MemorySpace.SMEM),       # gamma_s
        pl.BlockSpec(memory_space=pltpu.MemorySpace.SMEM),       # gamma_c
    ]
    out_spec = pl.BlockSpec((1, C, n_pad), lambda b, n: (b, 0, 0))

    flops = int(B * (2 * (Cq + C + 1) * n_pad * n_pad
                     + 4 * C * C * n_pad + 2 * C * C * C))
    transcendentals = int(B * (n_pad * n_pad + C * C))
    bytes_accessed = int(4 * B * (2 * C + 2 * Cq) * n_pad + 4 * (C * C + C))

    # VMEM budget: streamed tiles (x2 buffers), resident k/out blocks, scratches,
    # and the (TN, Np) f32/bf16 score temporaries, with headroom; capped per chip.
    vmem_est = 4 * (2 * (C + Cq) * tile_n + 2 * Cq * n_pad + 2 * C * n_pad
                    + 2 * C * n_pad + C * C + 2 * tile_n * n_pad)
    cap = (96 << 20) if big_vmem else (52 << 20)
    vmem_limit = int(max(min(int(vmem_est * 1.5) + (8 << 20), cap), 32 << 20))

    # TODO(synk): on v7x, set pipeline_mode=pl.Buffered(1) on the k / out blocks
    # (constant block index across the n axis) to shave VMEM, and add a size-2
    # parallel axis splitting the C rows when B == 1 so both TensorCores are fed.
    out_flat = pl.pallas_call(
        kernel,
        out_shape=jax.ShapeDtypeStruct((B, C, n_pad), jnp.float32),
        grid=(B, nt),
        in_specs=in_specs,
        out_specs=out_spec,
        scratch_shapes=[
            pltpu.VMEM((C, n_pad), jnp.float32),     # w_s accumulator
            pltpu.VMEM((C, n_pad), jnp.float32),     # resident copy of x (dedup)
            pltpu.VMEM((C, C), jnp.float32),         # channel Gram accumulator
        ],
        compiler_params=pltpu.CompilerParams(
            dimension_semantics=("parallel", "arbitrary"),
            vmem_limit_bytes=vmem_limit),
        cost_estimate=pl.CostEstimate(flops=flops,
                                      transcendentals=transcendentals,
                                      bytes_accessed=bytes_accessed),
    )(x_flat, qm, k,
      jnp.asarray(params["wv"], jnp.float32),
      jnp.asarray(params["bv"], jnp.float32).reshape(1, C),
      jnp.asarray(params["gamma_s"], jnp.float32).reshape(1),
      jnp.asarray(params["gamma_c"], jnp.float32).reshape(1))

    return out_flat[:, :, :N].reshape(B, C, H, W, D)


# ---------------------------------------------------------------------------
# pure-JAX reference (mirrors the PyTorch forward exactly, original association)
# ---------------------------------------------------------------------------
def reference(x, p):
    B, C, H, W, D = x.shape
    N = H * W * D
    hp = lax.Precision.HIGHEST
    xf = x.reshape(B, C, N)

    q = _conv3tap(x, p["wq"], p["bq"], 3)
    k = _conv3tap(x, p["wk"], p["bk"], 2)
    j = _conv3tap(x, p["wj"], p["bj"], 4)
    v = jnp.einsum("oc,bcn->bon", p["wv"], xf, precision=hp) + p["bv"][None, :, None]

    aff1 = jnp.einsum("bcn,bcm->bnm", q, k, precision=hp)
    aff2 = jnp.einsum("bcn,bcm->bnm", j, k, precision=hp)
    aff = jnp.einsum("bnk,bkm->bnm", aff1, aff2, precision=hp)
    aff = jax.nn.softmax(aff, axis=-1)
    w_s = jnp.einsum("bcn,bnm->bcm", v, aff, precision=hp)
    sab = p["gamma_s"] * w_s + xf

    ca1 = jnp.einsum("bcn,bdn->bcd", xf, xf, precision=hp)
    ca = jnp.einsum("bcd,bde->bce", ca1, ca1, precision=hp)
    can = jnp.max(ca, axis=-1, keepdims=True) - ca
    can = jax.nn.softmax(can, axis=-1)
    w_c = jnp.einsum("bcd,bdn->bcn", can, xf, precision=hp)
    cab = p["gamma_c"] * w_c + xf

    return (sab + cab + xf).reshape(B, C, H, W, D)


if __name__ == "__main__":
    key = jax.random.PRNGKey(0)
    ks = jax.random.split(key, 10)

    B, C = 2, 32
    Cq = C // 8

    # gamma is nominally zeros(1) in __init__ — use small nonzero deterministic
    # values so both attention paths are exercised.
    params = {
        "wq": 0.1 * jax.random.normal(ks[1], (Cq, C, 3), jnp.float32),
        "bq": 0.1 * jax.random.normal(ks[2], (Cq,), jnp.float32),
        "wk": 0.1 * jax.random.normal(ks[3], (Cq, C, 3), jnp.float32),
        "bk": 0.1 * jax.random.normal(ks[4], (Cq,), jnp.float32),
        "wj": 0.1 * jax.random.normal(ks[5], (Cq, C, 3), jnp.float32),
        "bj": 0.1 * jax.random.normal(ks[6], (Cq,), jnp.float32),
        "wv": 0.1 * jax.random.normal(ks[7], (C, C), jnp.float32),
        "bv": 0.1 * jax.random.normal(ks[8], (C,), jnp.float32),
        "gamma_s": jnp.float32(0.5),
        "gamma_c": jnp.float32(0.25),
    }

    ok = True
    for (H, W, D) in [(8, 8, 4),     # N = 256: lane-dense row tiles, no padding
                      (6, 5, 4)]:    # N = 120: exercises the pad + mask path
        x = 0.1 * jax.random.normal(ks[0], (B, C, H, W, D), jnp.float32)
        out = jax.block_until_ready(affinity_attention_3d(x, params))
        ref = jax.block_until_ready(reference(x, params))
        assert out.shape == (B, C, H, W, D)
        err = float(jnp.max(jnp.abs(out - ref)))
        if not np.allclose(np.asarray(out), np.asarray(ref),
                           rtol=5e-3, atol=5e-3):
            ok = False
            print("MISMATCH shape=%s max_abs_err=%g" % ((H, W, D), err))

    if ok:
        print("KERNEL_OK")
</pallas_src>

<mosaic_0001>
module attributes {stable_mosaic.version = 11 : i64} {
  func.func @kernel(%arg0: i32, %arg1: i32, %arg2: memref<1x32x128xf32, #tpu.memory_space<vmem>>, %arg3: memref<1x4x128xf32, #tpu.memory_space<vmem>>, %arg4: memref<1x4x256xf32, #tpu.memory_space<vmem>>, %arg5: memref<32x32xf32, #tpu.memory_space<vmem>>, %arg6: memref<1x32xf32, #tpu.memory_space<vmem>>, %arg7: memref<1xf32, #tpu.memory_space<smem>>, %arg8: memref<1xf32, #tpu.memory_space<smem>>, %arg9: memref<1x32x256xf32, #tpu.memory_space<vmem>>, %arg10: memref<32x256xf32, #tpu.memory_space<vmem>>, %arg11: memref<32x256xf32, #tpu.memory_space<vmem>>, %arg12: memref<32x32xf32, #tpu.memory_space<vmem>>) attributes {dimension_semantics = [#tpu.dimension_semantics<parallel>, #tpu.dimension_semantics<arbitrary>], iteration_bounds = array<i64: 2, 2>, scalar_prefetch = 0 : i64, scratch_operands = 3 : i64, tpu.core_type = #tpu.core_type<tc>, window_params = [{transform_indices = @transform_0, window_bounds = array<i64: 1, 32, 128>}, {transform_indices = @transform_1, window_bounds = array<i64: 1, 4, 128>}, {transform_indices = @transform_2, window_bounds = array<i64: 1, 4, 256>}, {pipeline_mode = #tpu.pipeline_mode<synchronous>, transform_indices = @transform_3, window_bounds = array<i64: 32, 32>}, {pipeline_mode = #tpu.pipeline_mode<synchronous>, transform_indices = @transform_4, window_bounds = array<i64: 1, 32>}, {transform_indices = @transform_5, window_bounds = array<i64: 1>}, {transform_indices = @transform_6, window_bounds = array<i64: 1>}, {transform_indices = @transform_7, window_bounds = array<i64: 1, 32, 256>}]} {
    %c0_i32 = arith.constant 0 : i32
    %0 = arith.cmpi eq, %arg1, %c0_i32 : i32
    %1 = arith.extui %0 : i1 to i32
    %c0_i32_0 = arith.constant 0 : i32
    %2 = arith.cmpi ne, %1, %c0_i32_0 : i32
    scf.if %2 {
      %cst_29 = arith.constant 0.000000e+00 : f32
      %42 = vector.broadcast %cst_29 : f32 to vector<32x256xf32>
      %c0_30 = arith.constant 0 : index
      %c0_31 = arith.constant 0 : index
      %43 = vector.load %arg10[%c0_30, %c0_31] : memref<32x256xf32, #tpu.memory_space<vmem>>, vector<32x256xf32>
      tpu.vector_store %arg10[%c0_30, %c0_31], %42 {strides = array<i32>} : memref<32x256xf32, #tpu.memory_space<vmem>>, vector<32x256xf32>,
      %cst_32 = arith.constant 0.000000e+00 : f32
      %44 = vector.broadcast %cst_32 : f32 to vector<32x32xf32>
      %c0_33 = arith.constant 0 : index
      %c0_34 = arith.constant 0 : index
      %45 = vector.load %arg12[%c0_33, %c0_34] : memref<32x32xf32, #tpu.memory_space<vmem>>, vector<32x32xf32>
      tpu.vector_store %arg12[%c0_33, %c0_34], %44 {strides = array<i32>} : memref<32x32xf32, #tpu.memory_space<vmem>>, vector<32x32xf32>,
    } else {
    }
    %c0 = arith.constant 0 : index
    %c0_1 = arith.constant 0 : index
    %c0_2 = arith.constant 0 : index
    %3 = vector.load %arg2[%c0, %c0_1, %c0_2] : memref<1x32x128xf32, #tpu.memory_space<vmem>>, vector<1x32x128xf32>
    %4 = vector.shape_cast %3 : vector<1x32x128xf32> to vector<32x128xf32>
    %c0_3 = arith.constant 0 : index
    %c0_4 = arith.constant 0 : index
    %c0_5 = arith.constant 0 : index
    %5 = vector.load %arg3[%c0_3, %c0_4, %c0_5] : memref<1x4x128xf32, #tpu.memory_space<vmem>>, vector<1x4x128xf32>
    %6 = vector.shape_cast %5 : vector<1x4x128xf32> to vector<4x128xf32>
    %c0_6 = arith.constant 0 : index
    %c0_7 = arith.constant 0 : index
    %c0_8 = arith.constant 0 : index
    %7 = vector.load %arg4[%c0_6, %c0_7, %c0_8] : memref<1x4x256xf32, #tpu.memory_space<vmem>>, vector<1x4x256xf32>
    %8 = vector.shape_cast %7 : vector<1x4x256xf32> to vector<4x256xf32>
    %c128_i32 = arith.constant 128 : i32
    %9 = arith.muli %arg1, %c128_i32 : i32
    %10 = tpu.assume_multiple %9, 128 : i32
    %c0_9 = arith.constant 0 : index
    %11 = arith.index_cast %10 : i32 to index
    %12 = vector.load %arg11[%c0_9, %11] : memref<32x256xf32, #tpu.memory_space<vmem>>, vector<32x128xf32>
    tpu.vector_store %arg11[%c0_9, %11], %4 {strides = array<i32>} : memref<32x256xf32, #tpu.memory_space<vmem>>, vector<32x128xf32>,
    %c0_10 = arith.constant 0 : index
    %c0_11 = arith.constant 0 : index
    %13 = vector.load %arg12[%c0_10, %c0_11] : memref<32x32xf32, #tpu.memory_space<vmem>>, vector<32x32xf32>
    %cst = arith.constant dense<0.000000e+00> : vector<32x32xf32>
    %14 = tpu.matmul %4, %4, %cst {dimension_numbers = #tpu.dot_dimension_numbers<[1], [1], [0], [0], [0, 0, 1, 0], [], []>} : vector<32x128xf32>, vector<32x128xf32>, vector<32x32xf32> -> vector<32x32xf32>
    %15 = arith.addf %13, %14 : vector<32x32xf32>
    %c0_12 = arith.constant 0 : index
    %c0_13 = arith.constant 0 : index
    %16 = vector.load %arg12[%c0_12, %c0_13] : memref<32x32xf32, #tpu.memory_space<vmem>>, vector<32x32xf32>
    tpu.vector_store %arg12[%c0_12, %c0_13], %15 {strides = array<i32>} : memref<32x32xf32, #tpu.memory_space<vmem>>, vector<32x32xf32>,
    %cst_14 = arith.constant dense<0.000000e+00> : vector<128x256xf32>
    %17 = tpu.matmul %6, %8, %cst_14 {dimension_numbers = #tpu.dot_dimension_numbers<[0], [0], [1], [1], [0, 1, 1, 1], [], []>} : vector<4x128xf32>, vector<4x256xf32>, vector<128x256xf32> -> vector<128x256xf32>
    %cst_15 = arith.constant dense<0xFF800000> : vector<128xf32>
    %18 = vector.multi_reduction <maximumf>, %17, %cst_15 [1] : vector<128x256xf32> to vector<128xf32>
    %19 = vector.shape_cast %18 : vector<128xf32> to vector<128x1xf32>
    %20 = vector.broadcast %19 : vector<128x1xf32> to vector<128x256xf32>
    %21 = arith.subf %17, %20 : vector<128x256xf32>
    %22 = arith.truncf %21 : vector<128x256xf32> to vector<128x256xbf16>
    %23 = math.exp %22 : vector<128x256xbf16>
    %cst_16 = arith.constant 1.000000e+00 : bf16
    %24 = vector.broadcast %cst_16 : bf16 to vector<256x1xbf16>
    %cst_17 = arith.constant dense<0.000000e+00> : vector<128x1xf32>
    %25 = tpu.matmul %23, %24, %cst_17 {dimension_numbers = #tpu.dot_dimension_numbers<[1], [0], [0], [1], [0, 0, 1, 1], [], []>} : vector<128x256xbf16>, vector<256x1xbf16>, vector<128x1xf32> -> vector<128x1xf32>
    %26 = tpu.reciprocal %25 {approx = true} : vector<128x1xf32> -> vector<128x1xf32>
    %c0_18 = arith.constant 0 : index
    %c0_19 = arith.constant 0 : index
    %27 = vector.load %arg5[%c0_18, %c0_19] : memref<32x32xf32, #tpu.memory_space<vmem>>, vector<32x32xf32>
    %cst_20 = arith.constant dense<0.000000e+00> : vector<128x32xf32>
    %28 = tpu.matmul %4, %27, %cst_20 {dimension_numbers = #tpu.dot_dimension_numbers<[0], [1], [1], [0], [0, 1, 1, 0], [], []>} : vector<32x128xf32>, vector<32x32xf32>, vector<128x32xf32> -> vector<128x32xf32>
    %c0_21 = arith.constant 0 : index
    %c0_22 = arith.constant 0 : index
    %29 = vector.load %arg6[%c0_21, %c0_22] : memref<1x32xf32, #tpu.memory_space<vmem>>, vector<1x32xf32>
    %30 = vector.broadcast %29 : vector<1x32xf32> to vector<128x32xf32>
    %31 = arith.addf %28, %30 : vector<128x32xf32>
    %32 = vector.broadcast %26 : vector<128x1xf32> to vector<128x32xf32>
    %33 = arith.mulf %31, %32 : vector<128x32xf32>
    %34 = arith.truncf %33 : vector<128x32xf32> to vector<128x32xbf16>
    %c0_23 = arith.constant 0 : index
    %c0_24 = arith.constant 0 : index
    %35 = vector.load %arg10[%c0_23, %c0_24] : memref<32x256xf32, #tpu.memory_space<vmem>>, vector<32x256xf32>
    %cst_25 = arith.constant dense<0.000000e+00> : vector<32x256xf32>
    %36 = tpu.matmul %34, %23, %cst_25 {dimension_numbers = #tpu.dot_dimension_numbers<[0], [0], [1], [1], [0, 1, 1, 1], [], []>} : vector<128x32xbf16>, vector<128x256xbf16>, vector<32x256xf32> -> vector<32x256xf32>
    %37 = arith.addf %35, %36 : vector<32x256xf32>
    %c0_26 = arith.constant 0 : index
    %c0_27 = arith.constant 0 : index
    %38 = vector.load %arg10[%c0_26, %c0_27] : memref<32x256xf32, #tpu.memory_space<vmem>>, vector<32x256xf32>
    tpu.vector_store %arg10[%c0_26, %c0_27], %37 {strides = array<i32>} : memref<32x256xf32, #tpu.memory_space<vmem>>, vector<32x256xf32>,
    %c1_i32 = arith.constant 1 : i32
    %39 = arith.cmpi eq, %arg1, %c1_i32 : i32
    %40 = arith.extui %39 : i1 to i32
    %c0_i32_28 = arith.constant 0 : i32
    %41 = arith.cmpi ne, %40, %c0_i32_28 : i32
    scf.if %41 {
      %c0_29 = arith.constant 0 : index
      %c0_30 = arith.constant 0 : index
      %42 = vector.load %arg11[%c0_29, %c0_30] : memref<32x256xf32, #tpu.memory_space<vmem>>, vector<32x256xf32>
      %c0_31 = arith.constant 0 : index
      %c0_32 = arith.constant 0 : index
      %43 = vector.load %arg12[%c0_31, %c0_32] : memref<32x32xf32, #tpu.memory_space<vmem>>, vector<32x32xf32>
      %cst_33 = arith.constant dense<0.000000e+00> : vector<32x32xf32>
      %44 = tpu.matmul %43, %43, %cst_33 {dimension_numbers = #tpu.dot_dimension_numbers<[1], [0], [0], [1], [0, 0, 1, 1], [], []>} : vector<32x32xf32>, vector<32x32xf32>, vector<32x32xf32> -> vector<32x32xf32>
      %cst_34 = arith.constant dense<0xFF800000> : vector<32xf32>
      %45 = vector.multi_reduction <maximumf>, %44, %cst_34 [1] : vector<32x32xf32> to vector<32xf32>
      %46 = vector.shape_cast %45 : vector<32xf32> to vector<32x1xf32>
      %47 = vector.broadcast %46 : vector<32x1xf32> to vector<32x32xf32>
      %48 = arith.subf %47, %44 : vector<32x32xf32>
      %cst_35 = arith.constant dense<0xFF800000> : vector<32xf32>
      %49 = vector.multi_reduction <maximumf>, %48, %cst_35 [1] : vector<32x32xf32> to vector<32xf32>
      %50 = vector.shape_cast %49 : vector<32xf32> to vector<32x1xf32>
      %51 = vector.broadcast %50 : vector<32x1xf32> to vector<32x32xf32>
      %52 = arith.subf %48, %51 : vector<32x32xf32>
      %53 = math.exp %52 : vector<32x32xf32>
      %cst_36 = arith.constant dense<0.000000e+00> : vector<32xf32>
      %54 = vector.multi_reduction <add>, %53, %cst_36 [1] : vector<32x32xf32> to vector<32xf32>
      %55 = vector.shape_cast %54 : vector<32xf32> to vector<32x1xf32>
      %56 = tpu.reciprocal %55 {approx = true} : vector<32x1xf32> -> vector<32x1xf32>
      %57 = vector.broadcast %56 : vector<32x1xf32> to vector<32x32xf32>
      %58 = arith.mulf %53, %57 : vector<32x32xf32>
      %cst_37 = arith.constant dense<0.000000e+00> : vector<32x256xf32>
      %59 = tpu.matmul %58, %42, %cst_37 {dimension_numbers = #tpu.dot_dimension_numbers<[1], [0], [0], [1], [0, 0, 1, 1], [], []>} : vector<32x32xf32>, vector<32x256xf32>, vector<32x256xf32> -> vector<32x256xf32>
      %c0_38 = arith.constant 0 : index
      %60 = memref.load %arg7[%c0_38] : memref<1xf32, #tpu.memory_space<smem>>
      %c0_39 = arith.constant 0 : index
      %c0_40 = arith.constant 0 : index
      %61 = vector.load %arg10[%c0_39, %c0_40] : memref<32x256xf32, #tpu.memory_space<vmem>>, vector<32x256xf32>
      %62 = vector.broadcast %60 : f32 to vector<32x256xf32>
      %63 = arith.mulf %62, %61 : vector<32x256xf32>
      %c0_41 = arith.constant 0 : index
      %64 = memref.load %arg8[%c0_41] : memref<1xf32, #tpu.memory_space<smem>>
      %65 = vector.broadcast %64 : f32 to vector<32x256xf32>
      %66 = arith.mulf %65, %59 : vector<32x256xf32>
      %67 = arith.addf %63, %66 : vector<32x256xf32>
      %cst_42 = arith.constant 3.000000e+00 : f32
      %68 = vector.broadcast %cst_42 : f32 to vector<32x256xf32>
      %69 = arith.mulf %68, %42 : vector<32x256xf32>
      %70 = arith.addf %67, %69 : vector<32x256xf32>
      %c0_43 = arith.constant 0 : index
      %c0_44 = arith.constant 0 : index
      %c0_45 = arith.constant 0 : index
      %71 = vector.load %arg9[%c0_43, %c0_44, %c0_45] : memref<1x32x256xf32, #tpu.memory_space<vmem>>, vector<1x32x256xf32>
      %72 = vector.shape_cast %71 : vector<1x32x256xf32> to vector<32x256xf32>
      %73 = vector.shape_cast %70 : vector<32x256xf32> to vector<1x32x256xf32>
      tpu.vector_store %arg9[%c0_43, %c0_44, %c0_45], %73 {strides = array<i32>} : memref<1x32x256xf32, #tpu.memory_space<vmem>>, vector<1x32x256xf32>,
    } else {
    }
    return
  }
  func.func @transform_0(%arg0: i32, %arg1: i32) -> (i32, i32, i32) {
    %c0_i32 = arith.constant 0 : i32
    %c0_i32_0 = arith.constant 0 : i32
    return %arg0, %c0_i32, %arg1 : i32, i32, i32
  }
  func.func @transform_1(%arg0: i32, %arg1: i32) -> (i32, i32, i32) {
    %c0_i32 = arith.constant 0 : i32
    %c0_i32_0 = arith.constant 0 : i32
    return %arg0, %c0_i32, %arg1 : i32, i32, i32
  }
  func.func @transform_2(%arg0: i32, %arg1: i32) -> (i32, i32, i32) {
    %c0_i32 = arith.constant 0 : i32
    %c0_i32_0 = arith.constant 0 : i32
    %c0_i32_1 = arith.constant 0 : i32
    return %arg0, %c0_i32, %c0_i32_0 : i32, i32, i32
  }
  func.func @transform_3(%arg0: i32, %arg1: i32) -> (i32, i32) {
    %c0_i32 = arith.constant 0 : i32
    %c0_i32_0 = arith.constant 0 : i32
    %c0_i32_1 = arith.constant 0 : i32
    return %c0_i32, %c0_i32_0 : i32, i32
  }
  func.func @transform_4(%arg0: i32, %arg1: i32) -> (i32, i32) {
    %c0_i32 = arith.constant 0 : i32
    %c0_i32_0 = arith.constant 0 : i32
    %c0_i32_1 = arith.constant 0 : i32
    return %c0_i32, %c0_i32_0 : i32, i32
  }
  func.func @transform_5(%arg0: i32, %arg1: i32) -> i32 {
    %c0_i32 = arith.constant 0 : i32
    %c0_i32_0 = arith.constant 0 : i32
    return %c0_i32 : i32
  }
  func.func @transform_6(%arg0: i32, %arg1: i32) -> i32 {
    %c0_i32 = arith.constant 0 : i32
    %c0_i32_0 = arith.constant 0 : i32
    return %c0_i32 : i32
  }
  func.func @transform_7(%arg0: i32, %arg1: i32) -> (i32, i32, i32) {
    %c0_i32 = arith.constant 0 : i32
    %c0_i32_0 = arith.constant 0 : i32
    %c0_i32_1 = arith.constant 0 : i32
    return %arg0, %c0_i32, %c0_i32_0 : i32, i32, i32
  }
}

</mosaic_0001>

<llo_original>
// kernel: tpu_custom_call.1
$region0: #{tpu_custom_call.1}
  #allocation0 [shape = 'u32[]', space=smem, size = 0x4, offset = 0x4, fixed_abs, tag = 'smem constant byte address 0x4 - core index']
  #allocation1 [shape = 'u32[144,128]{1,0:T(1,128)}', space=vmem, size = 0x12000, scoped, tag = 'internal scratch']
  #allocation2 [shape = 'f32[32,256]{1,0:T(8,128)}', space=vmem, size = 0x8000, scoped, tag = 'scratch operand']
  #allocation3 [shape = 'f32[32,256]{1,0:T(8,128)}', space=vmem, size = 0x8000, scoped, tag = 'scratch operand']
  #allocation4 [shape = 'f32[32,32]{1,0:T(8,128)}', space=vmem, size = 0x4000, scoped, tag = 'scratch operand']
  #allocation5 [shape = 'f32[1]{0:T(128)S(6)}', space=smem, size = 0x200, scoped, tag = 'scoped memory for tpu_custom_call.1']
  #allocation6 [shape = 'f32[1]{0:T(128)S(6)}', space=smem, size = 0x200, scoped, tag = 'scoped memory for tpu_custom_call.1']
  %s0 = inlined_call_operand.hbm [shape: f32[2,32,256], index: 0, kind: input, shape index: {}]
  %s1 = inlined_call_operand.hbm [shape: f32[2,4,256], index: 1, kind: input, shape index: {}]
  %s2 = inlined_call_operand.hbm [shape: f32[2,4,256], index: 2, kind: input, shape index: {}]
  %s3 = inlined_call_operand.hbm [shape: f32[32,32], index: 3, kind: input, shape index: {}]
  %s4 = inlined_call_operand.vmem [shape: f32[1,32], index: 4, kind: input, shape index: {}]
  %s5 = inlined_call_operand.<no memory space> [shape: f32[1], index: 5, kind: input, shape index: {}]
  %s6 = inlined_call_operand.<no memory space> [shape: f32[1], index: 6, kind: input, shape index: {}]
  %s7 = inlined_call_operand.hbm [shape: f32[2,32,256], index: 7, kind: output, shape index: {}]
  %s8 = sld [smem:[#allocation0]]
  $region85: #{tpu_custom_call.1} parent=0
    _
  %s10 = ssub.s32 1, %s8
  %s11 = scalar_select 0, %s10, %s8
  %12 = sst [smem:[#allocation5]] %s5
  %13 = sst [smem:[#allocation6]] %s6
  $region1: #{tpu_custom_call.1} parent=0
    #allocation7 [shape = 'u8[32768]{0}', space=vmem, size = 0x8000, scoped, tag = 'input window, operand 0']
    #allocation8 [shape = 's32[2]{0}', space=sflag, size = 0x8, scoped, tag = 'scoped memory for tpu_custom_call.1']
    #allocation9 [shape = 's32[2]{0}', space=sflag, size = 0x8, scoped, tag = 'scoped memory for tpu_custom_call.1']
    #allocation10 [shape = 'u8[4096]{0}', space=vmem, size = 0x1000, scoped, tag = 'input window, operand 1']
    #allocation11 [shape = 's32[2]{0}', space=sflag, size = 0x8, scoped, tag = 'scoped memory for tpu_custom_call.1']
    #allocation12 [shape = 'u8[8192]{0}', space=vmem, size = 0x2000, scoped, tag = 'input window, operand 2']
    #allocation13 [shape = 'u8[16384]{0}', space=vmem, size = 0x4000, scoped, tag = 'input window, operand 3, single buffered']
    #allocation14 [shape = 's32[1]{0}', space=sflag, size = 0x4, scoped, tag = 'scoped memory for tpu_custom_call.1']
    #allocation15 [shape = 'u8[65536]{0}', space=vmem, size = 0x10000, scoped, tag = 'output window, operand 0']
    %14 = vsyncpa [#allocation8], 0
    %s15 = scalar_lea.sflag [#allocation8], 1
    %16 = vsyncpa %s15, 0
    %17 = vsyncpa [#allocation11], 0
    %s18 = scalar_lea.sflag [#allocation11], 1
    %19 = vsyncpa %s18, 0
    %20 = vsyncpa [#allocation14], 0
    %21 = vsyncpa [#allocation9], 0
    %s22 = scalar_lea.sflag [#allocation9], 1
    %23 = vsyncpa %s22, 0
    loop: start=0, step=1, limit=6
    $region2: #{tpu_custom_call.1} parent=1 // loop_pre_header
      _
    $region3: #{tpu_custom_call.1} parent=1 // loop_header
      %s25 = sphi 0, %s29
      %p26 = scmp.ge.s32.totalorder %s25, 6
      %s32 = sphi 0, %s44
      %s33 = sphi 0, %s40
      %s34 = sphi 0, %s32
      %s35 = sphi 0, %s33
      %s36 = sphi 0, %s34
      %s37 = sphi 0, %s35
      %s49 = sphi 0, %s51
      %s52 = sphi 0, %s49
      %s53 = sphi 0, %s52
      %s69 = sphi 0, %s53
      %s77 = sphi 0, %s79
      %s80 = sphi 0, %s77
      %s81 = sphi 0, %s80
      %s97 = sphi 0, %s81
      %s103 = sphi 0, %s105
      %s106 = sphi 0, %s103
      %s107 = sphi 0, %s106
      %s123 = sphi 0, %s107
      %s127 = sphi 0, %s127
      %s129 = sphi 0, %s127
      %s130 = sphi 0, %s129
      %s144 = sphi 0, %s130
      %s148 = sphi 0, %s148
      %s150 = sphi 0, %s148
      %s151 = sphi 0, %s150
      %s165 = sphi 0, %s151
      %s169 = sphi 0, %s169
      %s171 = sphi 0, %s169
      %s172 = sphi 0, %s171
      %s186 = sphi 0, %s172
      %s190 = sphi 0, %s190
      %s192 = sphi 0, %s190
      %s193 = sphi 0, %s192
      %s207 = sphi 0, %s193
      %s213 = sphi 0, %s215
      %s216 = sphi 0, %s213
      %s217 = sphi 0, %s216
      %s233 = sphi 0, %s217
    $region4: #{tpu_custom_call.1} parent=1 // loop_header_branch
      %28 = sbr.rel (%p26) target = $region8
    $region5: #{tpu_custom_call.1} parent=1 // loop_body
      %s30 = ssub.s32 %s25, 1
      %s31 = ssub.s32 %s25, 2
      %s38 = sadd.s32 1, %s33
      %p39 = scmp.ge.s32.totalorder %s38, 2
      %s40 = scalar_select %p39, 0, %s38
      %s41 = sadd.s32 1, %s32
      %s42 = scalar_select %p39, %s41, %s32
      %p43 = scmp.ge.s32.totalorder %s42, 2
      %s44 = scalar_select %p43, 0, %s42
      %s45 = ssub.s32 %s32, %s44
      %s46 = ssub.s32 %s33, %s40
      %s47 = sor.u32 %s45, %s46
      %p48 = scmp.eq.s32.totalorder %s47, 0
      %s50 = sadd.s32 %s49, 1
      %s51 = scalar_select %p48, %s49, %s50
      %p54 = pneg %p48
      %p55 = scmp.eq.s32.totalorder %s25, 3
      %p56 = por %p54, %p55
      %p57 = scmp.ne.s32.totalorder %s49, %s52
      %p58 = scmp.eq.s32.totalorder %s25, 0
      %p59 = por %p57, %p58
      %p60 = scmp.ne.s32.totalorder %s49, %s52
      %p61 = scmp.eq.s32.totalorder %s30, 3
      %p62 = por %p60, %p61
      %p63 = scmp.ne.s32.totalorder %s52, %s53
      %p64 = scmp.eq.s32.totalorder %s30, 0
      %p65 = por %p63, %p64
      %p66 = scmp.ne.s32.totalorder %s52, %s53
      %p67 = scmp.eq.s32.totalorder %s31, 3
      %p68 = por %p66, %p67
      %p70 = scmp.ne.s32.totalorder %s53, %s69
      %p71 = scmp.eq.s32.totalorder %s31, 0
      %p72 = por %p70, %p71
      %s73 = ssub.s32 %s32, %s44
      %s74 = ssub.s32 %s33, %s40
      %s75 = sor.u32 %s73, %s74
      %p76 = scmp.eq.s32.totalorder %s75, 0
      %s78 = sadd.s32 %s77, 1
      %s79 = scalar_select %p76, %s77, %s78
      %p82 = pneg %p76
      %p83 = scmp.eq.s32.totalorder %s25, 3
      %p84 = por %p82, %p83
      %p85 = scmp.ne.s32.totalorder %s77, %s80
      %p86 = scmp.eq.s32.totalorder %s25, 0
      %p87 = por %p85, %p86
      %p88 = scmp.ne.s32.totalorder %s77, %s80
      %p89 = scmp.eq.s32.totalorder %s30, 3
      %p90 = por %p88, %p89
      %p91 = scmp.ne.s32.totalorder %s80, %s81
      %p92 = scmp.eq.s32.totalorder %s30, 0
      %p93 = por %p91, %p92
      %p94 = scmp.ne.s32.totalorder %s80, %s81
      %p95 = scmp.eq.s32.totalorder %s31, 3
      %p96 = por %p94, %p95
      %p98 = scmp.ne.s32.totalorder %s81, %s97
      %p99 = scmp.eq.s32.totalorder %s31, 0
      %p100 = por %p98, %p99
      %s101 = ssub.s32 %s32, %s44
      %p102 = scmp.eq.s32.totalorder %s101, 0
      %s104 = sadd.s32 %s103, 1
      %s105 = scalar_select %p102, %s103, %s104
      %p108 = pneg %p102
      %p109 = scmp.eq.s32.totalorder %s25, 3
      %p110 = por %p108, %p109
      %p111 = scmp.ne.s32.totalorder %s103, %s106
      %p112 = scmp.eq.s32.totalorder %s25, 0
      %p113 = por %p111, %p112
      %p114 = scmp.ne.s32.totalorder %s103, %s106
      %p115 = scmp.eq.s32.totalorder %s30, 3
      %p116 = por %p114, %p115
      %p117 = scmp.ne.s32.totalorder %s106, %s107
      %p118 = scmp.eq.s32.totalorder %s30, 0
      %p119 = por %p117, %p118
      %p120 = scmp.ne.s32.totalorder %s106, %s107
      %p121 = scmp.eq.s32.totalorder %s31, 3
      %p122 = por %p120, %p121
      %p124 = scmp.ne.s32.totalorder %s107, %s123
      %p125 = scmp.eq.s32.totalorder %s31, 0
      %p126 = por %p124, %p125
      %s128 = sadd.s32 %s127, 1
      %p131 = scmp.eq.s32.totalorder %s25, 3
      %p132 = scmp.ne.s32.totalorder %s127, %s129
      %p133 = scmp.eq.s32.totalorder %s25, 0
      %p134 = por %p132, %p133
      %p135 = scmp.ne.s32.totalorder %s127, %s129
      %p136 = scmp.eq.s32.totalorder %s30, 3
      %p137 = por %p135, %p136
      %p138 = scmp.ne.s32.totalorder %s129, %s130
      %p139 = scmp.eq.s32.totalorder %s30, 0
      %p140 = por %p138, %p139
      %p141 = scmp.ne.s32.totalorder %s129, %s130
      %p142 = scmp.eq.s32.totalorder %s31, 3
      %p143 = por %p141, %p142
      %p145 = scmp.ne.s32.totalorder %s130, %s144
      %p146 = scmp.eq.s32.totalorder %s31, 0
      %p147 = por %p145, %p146
      %s149 = sadd.s32 %s148, 1
      %p152 = scmp.eq.s32.totalorder %s25, 3
      %p153 = scmp.ne.s32.totalorder %s148, %s150
      %p154 = scmp.eq.s32.totalorder %s25, 0
      %p155 = por %p153, %p154
      %p156 = scmp.ne.s32.totalorder %s148, %s150
      %p157 = scmp.eq.s32.totalorder %s30, 3
      %p158 = por %p156, %p157
      %p159 = scmp.ne.s32.totalorder %s150, %s151
      %p160 = scmp.eq.s32.totalorder %s30, 0
      %p161 = por %p159, %p160
      %p162 = scmp.ne.s32.totalorder %s150, %s151
      %p163 = scmp.eq.s32.totalorder %s31, 3
      %p164 = por %p162, %p163
      %p166 = scmp.ne.s32.totalorder %s151, %s165
      %p167 = scmp.eq.s32.totalorder %s31, 0
      %p168 = por %p166, %p167
      %s170 = sadd.s32 %s169, 1
      %p173 = scmp.eq.s32.totalorder %s25, 3
      %p174 = scmp.ne.s32.totalorder %s169, %s171
      %p175 = scmp.eq.s32.totalorder %s25, 0
      %p176 = por %p174, %p175
      %p177 = scmp.ne.s32.totalorder %s169, %s171
      %p178 = scmp.eq.s32.totalorder %s30, 3
      %p179 = por %p177, %p178
      %p180 = scmp.ne.s32.totalorder %s171, %s172
      %p181 = scmp.eq.s32.totalorder %s30, 0
      %p182 = por %p180, %p181
      %p183 = scmp.ne.s32.totalorder %s171, %s172
      %p184 = scmp.eq.s32.totalorder %s31, 3
      %p185 = por %p183, %p184
      %p187 = scmp.ne.s32.totalorder %s172, %s186
      %p188 = scmp.eq.s32.totalorder %s31, 0
      %p189 = por %p187, %p188
      %s191 = sadd.s32 %s190, 1
      %p194 = scmp.eq.s32.totalorder %s25, 3
      %p195 = scmp.ne.s32.totalorder %s190, %s192
      %p196 = scmp.eq.s32.totalorder %s25, 0
      %p197 = por %p195, %p196
      %p198 = scmp.ne.s32.totalorder %s190, %s192
      %p199 = scmp.eq.s32.totalorder %s30, 3
      %p200 = por %p198, %p199
      %p201 = scmp.ne.s32.totalorder %s192, %s193
      %p202 = scmp.eq.s32.totalorder %s30, 0
      %p203 = por %p201, %p202
      %p204 = scmp.ne.s32.totalorder %s192, %s193
      %p205 = scmp.eq.s32.totalorder %s31, 3
      %p206 = por %p204, %p205
      %p208 = scmp.ne.s32.totalorder %s193, %s207
      %p209 = scmp.eq.s32.totalorder %s31, 0
      %p210 = por %p208, %p209
      %s211 = ssub.s32 %s32, %s44
      %p212 = scmp.eq.s32.totalorder %s211, 0
      %s214 = sadd.s32 %s213, 1
      %s215 = scalar_select %p212, %s213, %s214
      %p218 = pneg %p212
      %p219 = scmp.eq.s32.totalorder %s25, 3
      %p220 = por %p218, %p219
      %p221 = scmp.ne.s32.totalorder %s213, %s216
      %p222 = scmp.eq.s32.totalorder %s25, 0
      %p223 = por %p221, %p222
      %p224 = scmp.ne.s32.totalorder %s213, %s216
      %p225 = scmp.eq.s32.totalorder %s30, 3
      %p226 = por %p224, %p225
      %p227 = scmp.ne.s32.totalorder %s216, %s217
      %p228 = scmp.eq.s32.totalorder %s30, 0
      %p229 = por %p227, %p228
      %p230 = scmp.ne.s32.totalorder %s216, %s217
      %p231 = scmp.eq.s32.totalorder %s31, 3
      %p232 = por %p230, %p231
      %p234 = scmp.ne.s32.totalorder %s217, %s233
      %p235 = scmp.eq.s32.totalorder %s31, 0
      %p236 = por %p234, %p235
      %p237 = scmp.le.s32.totalorder 1, %s25
      %p238 = scmp.lt.s32.totalorder %s25, 5
      %p239 = pnand %p237, %p238
      %p240 = pneg %p239
      // Predicated region
      $region9: #{tpu_custom_call.1} parent=5 // pred_check
        _
      $region10: #{tpu_custom_call.1} parent=5 // pred_check_branch
        %242 = sbr.rel (%p239) target = $region12
      $region11: #{tpu_custom_call.1} parent=5 // pred_region
        %s243 = ssub.s32 %s25, 1
        // Predicated region
        $region13: #{tpu_custom_call.1} parent=11 // pred_check
          %p244 = pneg %p140
        $region14: #{tpu_custom_call.1} parent=11 // pred_check_branch
          %246 = sbr.rel (%p244) target = $region16
        $region15: #{tpu_custom_call.1} parent=11 // pred_region
          %s248 = ssub.s32 512, 512
          %249 = vsyncadd [#allocation14], %s248
          %s250 = sshll.u32 [#allocation13], 4
          %s251 = int_to_ptr.vmem [resolvable:$true] %s250
          %256 = dma.hbm_to_vmem [thread:$0]  %s3, 512, %s251, [#allocation14], 128, 128, 8
        $region16: #{tpu_custom_call.1} parent=11 // pred_fallthru
          _
        // Predicated region
        $region17: #{tpu_custom_call.1} parent=11 // pred_check
          %p257 = pneg %p161
        $region18: #{tpu_custom_call.1} parent=11 // pred_check_branch
          %259 = sbr.rel (%p257) target = $region20
        $region19: #{tpu_custom_call.1} parent=11 // pred_region
          _
        $region20: #{tpu_custom_call.1} parent=11 // pred_fallthru
          _
        // Predicated region
        $region21: #{tpu_custom_call.1} parent=11 // pred_check
          %p260 = pneg %p182
        $region22: #{tpu_custom_call.1} parent=11 // pred_check_branch
          %262 = sbr.rel (%p260) target = $region24
        $region23: #{tpu_custom_call.1} parent=11 // pred_region
          _
        $region24: #{tpu_custom_call.1} parent=11 // pred_fallthru
          _
        // Predicated region
        $region25: #{tpu_custom_call.1} parent=11 // pred_check
          %p263 = pneg %p203
        $region26: #{tpu_custom_call.1} parent=11 // pred_check_branch
          %265 = sbr.rel (%p263) target = $region28
        $region27: #{tpu_custom_call.1} parent=11 // pred_region
          _
        $region28: #{tpu_custom_call.1} parent=11 // pred_fallthru
          _
      $region12: #{tpu_custom_call.1} parent=5 // pred_fallthru
        _
      %p266 = scmp.lt.s32.totalorder %s25, 4
      // Predicated region
      $region29: #{tpu_custom_call.1} parent=5 // pred_check
        %p267 = pneg %p266
      $region30: #{tpu_custom_call.1} parent=5 // pred_check_branch
        %269 = sbr.rel (%p267) target = $region32
      $region31: #{tpu_custom_call.1} parent=5 // pred_region
        // Predicated region
        $region33: #{tpu_custom_call.1} parent=31 // pred_check
          %p270 = pneg %p59
        $region34: #{tpu_custom_call.1} parent=31 // pred_check_branch
          %272 = sbr.rel (%p270) target = $region36
        $region35: #{tpu_custom_call.1} parent=31 // pred_region
          %s273 = sand.u32 %s49, 1
          %s274 = scalar_lea.sflag [#allocation8], %s273
          %s275 = sand.u32 %s49, 1
          %s276 = smul.addr %s275, 32
          %s277 = scalar_lea.vmem [#allocation7], %s276
          %s279 = ssub.s32 512, 512
          %280 = vsyncadd %s274, %s279
          %s281 = smul.addr %s32, 8
          %s282 = sadd.s32 %s33, %s281
          %s283 = smul.addr %s282, 128
          %s284 = scalar_lea.hbm %s0, %s283
          %s285 = sshll.u32 %s277, 4
          %s286 = int_to_ptr.vmem [resolvable:$true] %s285
          %291 = dma.hbm_to_vmem [thread:$0]  %s284, 512, %s286, %s274, 256, 128, 8
        $region36: #{tpu_custom_call.1} parent=31 // pred_fallthru
          _
        // Predicated region
        $region37: #{tpu_custom_call.1} parent=31 // pred_check
          %p292 = pneg %p87
        $region38: #{tpu_custom_call.1} parent=31 // pred_check_branch
          %294 = sbr.rel (%p292) target = $region40
        $region39: #{tpu_custom_call.1} parent=31 // pred_region
          %s295 = sand.u32 %s25, 1
          %s296 = scalar_lea.sflag [#allocation11], %s295
          %s297 = sand.u32 %s77, 1
          %s298 = smul.addr %s297, 4
          %s299 = scalar_lea.vmem [#allocation10], %s298
          %s301 = ssub.s32 64, 64
          %302 = vsyncadd %s296, %s301
          %s303 = smul.addr %s32, 2
          %s304 = sadd.s32 %s33, %s303
          %s305 = smul.addr %s304, 64
          %s306 = scalar_lea.hbm %s1, %s305
          %s308 = sshll.u32 %s299, 4
          %s309 = int_to_ptr.vmem [resolvable:$true] %s308
          %311 = dma.hbm_to_vmem [thread:$0]  %s306, 64, %s309, %s296
        $region40: #{tpu_custom_call.1} parent=31 // pred_fallthru
          _
        // Predicated region
        $region41: #{tpu_custom_call.1} parent=31 // pred_check
          %p312 = pneg %p113
        $region42: #{tpu_custom_call.1} parent=31 // pred_check_branch
          %314 = sbr.rel (%p312) target = $region44
        $region43: #{tpu_custom_call.1} parent=31 // pred_region
          %s315 = sand.u32 %s25, 1
          %s316 = scalar_lea.sflag [#allocation11], %s315
          %s317 = sand.u32 %s103, 1
          %s318 = smul.addr %s317, 8
          %s319 = scalar_lea.vmem [#allocation12], %s318
          %s321 = ssub.s32 128, 128
          %322 = vsyncadd %s316, %s321
          %s323 = smul.addr %s32, 2
          %s324 = smul.addr %s323, 64
          %s325 = scalar_lea.hbm %s2, %s324
          %s327 = sshll.u32 %s319, 4
          %s328 = int_to_ptr.vmem [resolvable:$true] %s327
          %330 = dma.hbm_to_vmem [thread:$0]  %s325, 128, %s328, %s316
        $region44: #{tpu_custom_call.1} parent=31 // pred_fallthru
          _
      $region32: #{tpu_custom_call.1} parent=5 // pred_fallthru
        _
      %p331 = scmp.le.s32.totalorder 1, %s25
      %p332 = scmp.lt.s32.totalorder %s25, 5
      %p333 = pnand %p331, %p332
      %p334 = pneg %p333
      // Predicated region
      $region45: #{tpu_custom_call.1} parent=5 // pred_check
        _
      $region46: #{tpu_custom_call.1} parent=5 // pred_check_branch
        %336 = sbr.rel (%p333) target = $region48
      $region47: #{tpu_custom_call.1} parent=5 // pred_region
        %s337 = ssub.s32 %s25, 1
        %s338 = sand.u32 %s52, 1
        %s339 = scalar_lea.sflag [#allocation8], %s338
        %s340 = sand.u32 %s52, 1
        %s341 = smul.addr %s340, 32
        %s342 = scalar_lea.vmem [#allocation7], %s341
        // Predicated region
        $region49: #{tpu_custom_call.1} parent=47 // pred_check
          %p343 = pneg %p65
        $region50: #{tpu_custom_call.1} parent=47 // pred_check_branch
          %345 = sbr.rel (%p343) target = $region52
        $region51: #{tpu_custom_call.1} parent=47 // pred_region
          %346 = dma.done %s339, 512
        $region52: #{tpu_custom_call.1} parent=47 // pred_fallthru
          _
        %s347 = sand.u32 %s30, 1
        %s348 = scalar_lea.sflag [#allocation11], %s347
        %s349 = sand.u32 %s80, 1
        %s350 = smul.addr %s349, 4
        %s351 = scalar_lea.vmem [#allocation10], %s350
        // Predicated region
        $region53: #{tpu_custom_call.1} parent=47 // pred_check
          %p352 = pneg %p93
        $region54: #{tpu_custom_call.1} parent=47 // pred_check_branch
          %354 = sbr.rel (%p352) target = $region56
        $region55: #{tpu_custom_call.1} parent=47 // pred_region
          %355 = dma.done %s348, 64
        $region56: #{tpu_custom_call.1} parent=47 // pred_fallthru
          _
        %s356 = sand.u32 %s30, 1
        %s357 = scalar_lea.sflag [#allocation11], %s356
        %s358 = sand.u32 %s106, 1
        %s359 = smul.addr %s358, 8
        %s360 = scalar_lea.vmem [#allocation12], %s359
        // Predicated region
        $region57: #{tpu_custom_call.1} parent=47 // pred_check
          %p361 = pneg %p119
        $region58: #{tpu_custom_call.1} parent=47 // pred_check_branch
          %363 = sbr.rel (%p361) target = $region60
        $region59: #{tpu_custom_call.1} parent=47 // pred_region
          %364 = dma.done %s357, 128
        $region60: #{tpu_custom_call.1} parent=47 // pred_fallthru
          _
        // Predicated region
        $region61: #{tpu_custom_call.1} parent=47 // pred_check
          %p365 = pneg %p140
        $region62: #{tpu_custom_call.1} parent=47 // pred_check_branch
          %367 = sbr.rel (%p365) target = $region64
        $region63: #{tpu_custom_call.1} parent=47 // pred_region
          %368 = dma.done [#allocation14], 512
        $region64: #{tpu_custom_call.1} parent=47 // pred_fallthru
          _
        %s369 = sand.u32 %s52, 1
        %s370 = scalar_lea.sflag [#allocation8], %s369
        %s371 = sand.u32 %s52, 1
        %s372 = smul.addr %s371, 32
        %s373 = scalar_lea.vmem [#allocation7], %s372
        %p374 = pneg %p65
        %p375 = pneg %p62
        %s376 = sand.u32 %s30, 1
        %s377 = scalar_lea.sflag [#allocation11], %s376
        %s378 = sand.u32 %s80, 1
        %s379 = smul.addr %s378, 4
        %s380 = scalar_lea.vmem [#allocation10], %s379
        %p381 = pneg %p93
        %p382 = pneg %p90
        %s383 = sand.u32 %s30, 1
        %s384 = scalar_lea.sflag [#allocation11], %s383
        %s385 = sand.u32 %s106, 1
        %s386 = smul.addr %s385, 8
        %s387 = scalar_lea.vmem [#allocation12], %s386
        %p388 = pneg %p119
        %p389 = pneg %p116
        %p390 = pneg %p140
        %p391 = pneg %p137
        %p392 = pneg %p161
        %p393 = pneg %p158
        %p394 = pneg %p182
        %p395 = pneg %p179
        %p396 = pneg %p203
        %p397 = pneg %p200
        %p398 = pneg %p229
        %p399 = pneg %p226
        %s400 = sand.u32 %s216, 1
        %s401 = scalar_lea.sflag [#allocation9], %s400
        %s402 = sand.u32 %s216, 1
        %s403 = smul.addr %s402, 64
        %s404 = scalar_lea.vmem [#allocation15], %s403
        %p407 = scmp.eq.s32.totalorder %s35, 0
        // Predicated region
        $region65: #{tpu_custom_call.1} parent=47 // pred_check
          %p408 = pneg %p407
        $region66: #{tpu_custom_call.1} parent=47 // pred_check_branch
          %410 = sbr.rel (%p408) target = $region68
        $region67: #{tpu_custom_call.1} parent=47 // pred_region
          %411 = vst [vmem:[#allocation2] sm:$0xff] 0.0
          %412 = vst [vmem:[#allocation2 + $0x8] sm:$0xff] 0.0
          %413 = vst [vmem:[#allocation2 + $0x10] sm:$0xff] 0.0
          %414 = vst [vmem:[#allocation2 + $0x18] sm:$0xff] 0.0
          %415 = vst [vmem:[#allocation2 + $0x20] sm:$0xff] 0.0
          %416 = vst [vmem:[#allocation2 + $0x28] sm:$0xff] 0.0
          %417 = vst [vmem:[#allocation2 + $0x30] sm:$0xff] 0.0
          %418 = vst [vmem:[#allocation2 + $0x38] sm:$0xff] 0.0
          %vm419 = vcmask 261120
          %420 = vst.msk [vmem:[#allocation4] sm:$0xff] %vm419, 0.0
          %421 = vst.msk [vmem:[#allocation4 + $0x8] sm:$0xff] %vm419, 0.0
          %422 = vst.msk [vmem:[#allocation4 + $0x10] sm:$0xff] %vm419, 0.0
          %423 = vst.msk [vmem:[#allocation4 + $0x18] sm:$0xff] %vm419, 0.0
        $region68: #{tpu_custom_call.1} parent=47 // pred_fallthru
          _
        %v424 = vld [vmem:[%s342] sm:$0xff]
        %v425 = vld [vmem:[%s342 + $0x8] sm:$0xff]
        %v426 = vld [vmem:[%s342 + $0x10] sm:$0xff]
        %v427 = vld [vmem:[%s342 + $0x18] sm:$0xff]
        %v428 = vld [vmem:[%s351] sm:$0xf]
        %v429 = vld [vmem:[%s360] sm:$0xff]
        %s430 = smul.u32 %s35, 128
        %s431 = sshra.s32 %s430, 7
        %s432 = sand.u32 %s430, 127
        %s433 = smul.addr %s431, 8
        %s434 = scalar_lea.vmem [#allocation3], %s433
        %435 = vst [vmem:[%s434] sm:$0xff] %v424
        %436 = vst [vmem:[%s434 + $0x10] sm:$0xff] %v425
        %437 = vst [vmem:[%s434 + $0x20] sm:$0xff] %v426
        %438 = vst [vmem:[%s434 + $0x30] sm:$0xff] %v427
        %v439 = vld [vmem:[#allocation4] sm:$0xff]
        %v440 = vld [vmem:[#allocation4 + $0x8] sm:$0xff]
        %v441 = vld [vmem:[#allocation4 + $0x10] sm:$0xff]
        %v442 = vld [vmem:[#allocation4 + $0x18] sm:$0xff]
        %443 = vmatprep.subr.mxu0 0.0
        %444 = vmatpush1.xpose.msra.mxu0 %v424
        %445 = vmatprep.subr.mxu0 0.0
        %446 = vmatpush1.xpose.msra.mxu0 %v425
        %447 = vmatprep.subr.mxu0 0.0
        %448 = vmatpush1.xpose.msra.mxu0 %v426
        %449 = vmatprep.subr.mxu0 0.0
        %450 = vmatpush1.xpose.msra.mxu0 %v427
        %451 = vmatprep.subr.mxu0 0.0
        %452 = vmatpush1.xpose.msra.mxu0 0.0
        %453 = vmatprep.subr.mxu0 0.0
        %454 = vmatpush1.xpose.msra.mxu0 0.0
        %455 = vmatprep.subr.mxu0 0.0
        %456 = vmatpush1.xpose.msra.mxu0 0.0
        %457 = vmatprep.subr.mxu0 0.0
        %458 = vmatpush1.xpose.msra.mxu0 0.0
        %459 = vmatprep.subr.mxu0 0.0
        %460 = vmatpush1.xpose.msra.mxu0 0.0
        %461 = vmatprep.subr.mxu0 0.0
        %462 = vmatpush1.xpose.msra.mxu0 0.0
        %463 = vmatprep.subr.mxu0 0.0
        %464 = vmatpush1.xpose.msra.mxu0 0.0
        %465 = vmatprep.subr.mxu0 0.0
        %466 = vmatpush1.xpose.msra.mxu0 0.0
        %467 = vmatprep.subr.mxu0 0.0
        %468 = vmatpush1.xpose.msra.mxu0 0.0
        %469 = vmatprep.subr.mxu0 0.0
        %470 = vmatpush1.xpose.msra.mxu0 0.0
        %471 = vmatprep.subr.mxu0 0.0
        %472 = vmatpush1.xpose.msra.mxu0 0.0
        %473 = vmatprep.subr.mxu0 0.0
        %474 = vmatpush1.xpose.msra.mxu0 0.0
        %475 = vmatprep.subr.mxu0 0.0
        %476 = vmatpush1.xpose.msra.mxu0 0.0
        %477 = vmatprep.subr.mxu0 0.0
        %478 = vmatpush1.xpose.msra.mxu0 0.0
        %479 = vmatprep.subr.mxu0 0.0
        %480 = vmatpush1.xpose.msra.mxu0 0.0
        %481 = vmatprep.subr.mxu0 0.0
        %482 = vmatpush1.xpose.msra.mxu0 0.0
        %483 = vmatprep.subr.mxu0 0.0
        %484 = vmatpush1.xpose.msra.mxu0 0.0
        %485 = vmatprep.subr.mxu0 0.0
        %486 = vmatpush1.xpose.msra.mxu0 0.0
        %487 = vmatprep.subr.mxu0 0.0
        %488 = vmatpush1.xpose.msra.mxu0 0.0
        %489 = vmatprep.subr.mxu0 0.0
        %490 = vmatpush1.xpose.msra.mxu0 0.0
        %491 = vmatprep.subr.mxu0 0.0
        %492 = vmatpush1.xpose.msra.mxu0 0.0
        %493 = vmatprep.subr.mxu0 0.0
        %494 = vmatpush1.xpose.msra.mxu0 0.0
        %495 = vmatprep.subr.mxu0 0.0
        %496 = vmatpush1.xpose.msra.mxu0 0.0
        %497 = vmatprep.subr.mxu0 0.0
        %498 = vmatpush1.xpose.msra.mxu0 0.0
        %499 = vmatprep.subr.mxu0 0.0
        %500 = vmatpush1.xpose.msra.mxu0 0.0
        %501 = vmatprep.subr.mxu0 0.0
        %502 = vmatpush1.xpose.msra.mxu0 0.0
        %503 = vmatprep.subr.mxu0 0.0
        %504 = vmatpush1.xpose.msra.mxu0 0.0
        %505 = vmatprep.subr.mxu0 0.0
        %506 = vmatpush1.xpose.msra.mxu0 0.0
        %507 = vmatprep.mubr.f32.mxu0 0.0
        %508 = vmatmul.mubr.f32.gmra.mrb[0].mxu0 %v424
        %v509 = vpop.f32.mrb[0].mxu0
        %v510 = vadd.f32 0.0, %v509
        %v511 = vpop.f32.mrb[0].mxu0
        %512 = vmatprep.mubr.f32.mxu0 0.0
        %513 = vmatmul.mubr.f32.gmra.mrb[0].mxu0 %v425
        %v514 = vpop.f32.mrb[0].mxu0
        %v515 = vadd.f32 0.0, %v514
        %v516 = vpop.f32.mrb[0].mxu0
        %517 = vmatprep.mubr.f32.mxu0 0.0
        %518 = vmatmul.mubr.f32.gmra.mrb[0].mxu0 %v426
        %v519 = vpop.f32.mrb[0].mxu0
        %v520 = vadd.f32 0.0, %v519
        %v521 = vpop.f32.mrb[0].mxu0
        %522 = vmatprep.mubr.f32.mxu0 0.0
        %523 = vmatmul.mubr.f32.gmra.mrb[0].mxu0 %v427
        %v524 = vpop.f32.mrb[0].mxu0
        %v525 = vadd.f32 0.0, %v524
        %v526 = vpop.f32.mrb[0].mxu0
        %527 = vdwg.mxu0
        %v528 = vadd.f32 %v439, %v510
        %v529 = vadd.f32 %v440, %v515
        %v530 = vadd.f32 %v441, %v520
        %v531 = vadd.f32 %v442, %v525
        %vm532 = vcmask 261120
        %533 = vst.msk [vmem:[#allocation4] sm:$0xff] %vm532, %v528
        %534 = vst.msk [vmem:[#allocation4 + $0x8] sm:$0xff] %vm532, %v529
        %535 = vst.msk [vmem:[#allocation4 + $0x10] sm:$0xff] %vm532, %v530
        %536 = vst.msk [vmem:[#allocation4 + $0x18] sm:$0xff] %vm532, %v531
        %537 = vxpose.xlu0.b32.start [1/16] %v428, 128
        %538 = vxpose.xlu0.b32.cont [2/16] 0.0, 128
        %539 = vxpose.xlu0.b32.cont [3/16] 0.0, 128
        %540 = vxpose.xlu0.b32.cont [4/16] 0.0, 128
        %541 = vxpose.xlu0.b32.cont [5/16] 0.0, 128
        %542 = vxpose.xlu0.b32.cont [6/16] 0.0, 128
        %543 = vxpose.xlu0.b32.cont [7/16] 0.0, 128
        %544 = vxpose.xlu0.b32.cont [8/16] 0.0, 128
        %545 = vxpose.xlu0.b32.cont [9/16] 0.0, 128
        %546 = vxpose.xlu0.b32.cont [10/16] 0.0, 128
        %547 = vxpose.xlu0.b32.cont [11/16] 0.0, 128
        %548 = vxpose.xlu0.b32.cont [12/16] 0.0, 128
        %549 = vxpose.xlu0.b32.cont [13/16] 0.0, 128
        %550 = vxpose.xlu0.b32.cont [14/16] 0.0, 128
        %551 = vxpose.xlu0.b32.cont [15/16] 0.0, 128
        %552 = vxpose.xlu0.b32.end [16/16] 0.0, 128
        %v553 = vpop.trf.xlu0
        %v554 = vpop.trf.xlu0
        %v555 = vpop.trf.xlu0
        %v556 = vpop.trf.xlu0
        %v557 = vpop.trf.xlu0
        %v558 = vpop.trf.xlu0
        %v559 = vpop.trf.xlu0
        %v560 = vpop.trf.xlu0
        %v561 = vpop.trf.xlu0
        %v562 = vpop.trf.xlu0
        %v563 = vpop.trf.xlu0
        %v564 = vpop.trf.xlu0
        %v565 = vpop.trf.xlu0
        %v566 = vpop.trf.xlu0
        %v567 = vpop.trf.xlu0
        %v568 = vpop.trf.xlu0
        %v570 = vcombine.high %v429, %v429
        %vm571 = vcmask 31744
        %v573 = vsel %vm571, %v553, 0
        %v576 = vsel %vm571, %v554, 0
        %v579 = vsel %vm571, %v555, 0
        %v582 = vsel %vm571, %v556, 0
        %v585 = vsel %vm571, %v557, 0
        %v588 = vsel %vm571, %v558, 0
        %v591 = vsel %vm571, %v559, 0
        %v594 = vsel %vm571, %v560, 0
        %v597 = vsel %vm571, %v561, 0
        %v600 = vsel %vm571, %v562, 0
        %v603 = vsel %vm571, %v563, 0
        %v606 = vsel %vm571, %v564, 0
        %v609 = vsel %vm571, %v565, 0
        %v612 = vsel %vm571, %v566, 0
        %v615 = vsel %vm571, %v567, 0
        %v618 = vsel %vm571, %v568, 0
        %vm620 = vcmask 1043456
        %v621 = vsel %vm620, %v429, 0
        %v623 = vsel %vm620, %v570, 0
        %625 = vmatprep.subr.mxu0 %v623
        %626 = vmatpush1.msra.mxu0 %v621
        %627 = vmatprep.subr.mxu0 0.0
        %628 = vmatpush1.msra.mxu0 0.0
        %629 = vmatprep.subr.mxu0 0.0
        %630 = vmatpush1.msra.mxu0 0.0
        %631 = vmatprep.subr.mxu0 0.0
        %632 = vmatpush1.msra.mxu0 0.0
        %633 = vmatprep.subr.mxu0 0.0
        %634 = vmatpush1.msra.mxu0 0.0
        %635 = vmatprep.subr.mxu0 0.0
        %636 = vmatpush1.msra.mxu0 0.0
        %637 = vmatprep.subr.mxu0 0.0
        %638 = vmatpush1.msra.mxu0 0.0
        %639 = vmatprep.subr.mxu0 0.0
        %640 = vmatpush1.msra.mxu0 0.0
        %641 = vmatprep.subr.mxu0 0.0
        %642 = vmatpush1.msra.mxu0 0.0
        %643 = vmatprep.subr.mxu0 0.0
        %644 = vmatpush1.msra.mxu0 0.0
        %645 = vmatprep.subr.mxu0 0.0
        %646 = vmatpush1.msra.mxu0 0.0
        %647 = vmatprep.subr.mxu0 0.0
        %648 = vmatpush1.msra.mxu0 0.0
        %649 = vmatprep.subr.mxu0 0.0
        %650 = vmatpush1.msra.mxu0 0.0
        %651 = vmatprep.subr.mxu0 0.0
        %652 = vmatpush1.msra.mxu0 0.0
        %653 = vmatprep.subr.mxu0 0.0
        %654 = vmatpush1.msra.mxu0 0.0
        %655 = vmatprep.subr.mxu0 0.0
        %656 = vmatpush1.msra.mxu0 0.0
        %657 = vmatprep.subr.mxu0 0.0
        %658 = vmatpush1.msra.mxu0 0.0
        %659 = vmatprep.subr.mxu0 0.0
        %660 = vmatpush1.msra.mxu0 0.0
        %661 = vmatprep.subr.mxu0 0.0
        %662 = vmatpush1.msra.mxu0 0.0
        %663 = vmatprep.subr.mxu0 0.0
        %664 = vmatpush1.msra.mxu0 0.0
        %665 = vmatprep.subr.mxu0 0.0
        %666 = vmatpush1.msra.mxu0 0.0
        %667 = vmatprep.subr.mxu0 0.0
        %668 = vmatpush1.msra.mxu0 0.0
        %669 = vmatprep.subr.mxu0 0.0
        %670 = vmatpush1.msra.mxu0 0.0
        %671 = vmatprep.subr.mxu0 0.0
        %672 = vmatpush1.msra.mxu0 0.0
        %673 = vmatprep.subr.mxu0 0.0
        %674 = vmatpush1.msra.mxu0 0.0
        %675 = vmatprep.subr.mxu0 0.0
        %676 = vmatpush1.msra.mxu0 0.0
        %677 = vmatprep.subr.mxu0 0.0
        %678 = vmatpush1.msra.mxu0 0.0
        %679 = vmatprep.subr.mxu0 0.0
        %680 = vmatpush1.msra.mxu0 0.0
        %681 = vmatprep.subr.mxu0 0.0
        %682 = vmatpush1.msra.mxu0 0.0
        %683 = vmatprep.subr.mxu0 0.0
        %684 = vmatpush1.msra.mxu0 0.0
        %685 = vmatprep.subr.mxu0 0.0
        %686 = vmatpush1.msra.mxu0 0.0
        %687 = vmatprep.subr.mxu0 0.0
        %688 = vmatpush1.msra.mxu0 0.0
        %689 = vmatprep.mubr.f32.mxu0 0.0
        %690 = vmatmul.mubr.f32.gmra.mrb[0].mxu0 %v573
        %v691 = vpop.f32.mrb[0].mxu0
        %v692 = vadd.f32 0.0, %v691
        %v693 = vpop.f32.mrb[0].mxu0
        %v694 = vadd.f32 0.0, %v693
        %695 = vmatprep.mubr.f32.mxu0 0.0
        %696 = vmatmul.mubr.f32.gmra.mrb[0].mxu0 %v576
        %v697 = vpop.f32.mrb[0].mxu0
        %v698 = vadd.f32 0.0, %v697
        %v699 = vpop.f32.mrb[0].mxu0
        %v700 = vadd.f32 0.0, %v699
        %701 = vmatprep.mubr.f32.mxu0 0.0
        %702 = vmatmul.mubr.f32.gmra.mrb[0].mxu0 %v579
        %v703 = vpop.f32.mrb[0].mxu0
        %v704 = vadd.f32 0.0, %v703
        %v705 = vpop.f32.mrb[0].mxu0
        %v706 = vadd.f32 0.0, %v705
        %707 = vmatprep.mubr.f32.mxu0 0.0
        %708 = vmatmul.mubr.f32.gmra.mrb[0].mxu0 %v582
        %v709 = vpop.f32.mrb[0].mxu0
        %v710 = vadd.f32 0.0, %v709
        %v711 = vpop.f32.mrb[0].mxu0
        %v712 = vadd.f32 0.0, %v711
        %713 = vmatprep.mubr.f32.mxu0 0.0
        %714 = vmatmul.mubr.f32.gmra.mrb[0].mxu0 %v585
        %v715 = vpop.f32.mrb[0].mxu0
        %v716 = vadd.f32 0.0, %v715
        %v717 = vpop.f32.mrb[0].mxu0
        %v718 = vadd.f32 0.0, %v717
        %719 = vmatprep.mubr.f32.mxu0 0.0
        %720 = vmatmul.mubr.f32.gmra.mrb[0].mxu0 %v588
        %v721 = vpop.f32.mrb[0].mxu0
        %v722 = vadd.f32 0.0, %v721
        %v723 = vpop.f32.mrb[0].mxu0
        %v724 = vadd.f32 0.0, %v723
        %725 = vmatprep.mubr.f32.mxu0 0.0
        %726 = vmatmul.mubr.f32.gmra.mrb[0].mxu0 %v591
        %v727 = vpop.f32.mrb[0].mxu0
        %v728 = vadd.f32 0.0, %v727
        %v729 = vpop.f32.mrb[0].mxu0
        %v730 = vadd.f32 0.0, %v729
        %731 = vmatprep.mubr.f32.mxu0 0.0
        %732 = vmatmul.mubr.f32.gmra.mrb[0].mxu0 %v594
        %v733 = vpop.f32.mrb[0].mxu0
        %v734 = vadd.f32 0.0, %v733
        %v735 = vpop.f32.mrb[0].mxu0
        %v736 = vadd.f32 0.0, %v735
        %737 = vmatprep.mubr.f32.mxu0 0.0
        %738 = vmatmul.mubr.f32.gmra.mrb[0].mxu0 %v597
        %v739 = vpop.f32.mrb[0].mxu0
        %v740 = vadd.f32 0.0, %v739
        %v741 = vpop.f32.mrb[0].mxu0
        %v742 = vadd.f32 0.0, %v741
        %743 = vmatprep.mubr.f32.mxu0 0.0
        %744 = vmatmul.mubr.f32.gmra.mrb[0].mxu0 %v600
        %v745 = vpop.f32.mrb[0].mxu0
        %v746 = vadd.f32 0.0, %v745
        %v747 = vpop.f32.mrb[0].mxu0
        %v748 = vadd.f32 0.0, %v747
        %749 = vmatprep.mubr.f32.mxu0 0.0
        %750 = vmatmul.mubr.f32.gmra.mrb[0].mxu0 %v603
        %v751 = vpop.f32.mrb[0].mxu0
        %v752 = vadd.f32 0.0, %v751
        %v753 = vpop.f32.mrb[0].mxu0
        %v754 = vadd.f32 0.0, %v753
        %755 = vmatprep.mubr.f32.mxu0 0.0
        %756 = vmatmul.mubr.f32.gmra.mrb[0].mxu0 %v606
        %v757 = vpop.f32.mrb[0].mxu0
        %v758 = vadd.f32 0.0, %v757
        %v759 = vpop.f32.mrb[0].mxu0
        %v760 = vadd.f32 0.0, %v759
        %761 = vmatprep.mubr.f32.mxu0 0.0
        %762 = vmatmul.mubr.f32.gmra.mrb[0].mxu0 %v609
        %v763 = vpop.f32.mrb[0].mxu0
        %v764 = vadd.f32 0.0, %v763
        %v765 = vpop.f32.mrb[0].mxu0
        %v766 = vadd.f32 0.0, %v765
        %767 = vmatprep.mubr.f32.mxu0 0.0
        %768 = vmatmul.mubr.f32.gmra.mrb[0].mxu0 %v612
        %v769 = vpop.f32.mrb[0].mxu0
        %v770 = vadd.f32 0.0, %v769
        %v771 = vpop.f32.mrb[0].mxu0
        %v772 = vadd.f32 0.0, %v771
        %773 = vmatprep.mubr.f32.mxu0 0.0
        %774 = vmatmul.mubr.f32.gmra.mrb[0].mxu0 %v615
        %v775 = vpop.f32.mrb[0].mxu0
        %v776 = vadd.f32 0.0, %v775
        %v777 = vpop.f32.mrb[0].mxu0
        %v778 = vadd.f32 0.0, %v777
        %779 = vmatprep.mubr.f32.mxu0 0.0
        %780 = vmatmul.mubr.f32.gmra.mrb[0].mxu0 %v618
        %v781 = vpop.f32.mrb[0].mxu0
        %v782 = vadd.f32 0.0, %v781
        %v783 = vpop.f32.mrb[0].mxu0
        %v784 = vadd.f32 0.0, %v783
        %785 = vdwg.mxu0
        %v786 = vmax.f32 %v692, %v694
        %787 = vmax.xlane.f32.xlu0 %v786
        %v788 = vpop.xlane.xlu0 %787
        %v789 = vmax.f32 %v698, %v700
        %790 = vmax.xlane.f32.xlu0 %v789
        %v791 = vpop.xlane.xlu0 %790
        %v792 = vmax.f32 %v704, %v706
        %793 = vmax.xlane.f32.xlu0 %v792
        %v794 = vpop.xlane.xlu0 %793
        %v795 = vmax.f32 %v710, %v712
        %796 = vmax.xlane.f32.xlu0 %v795
        %v797 = vpop.xlane.xlu0 %796
        %v798 = vmax.f32 %v716, %v718
        %799 = vmax.xlane.f32.xlu0 %v798
        %v800 = vpop.xlane.xlu0 %799
        %v801 = vmax.f32 %v722, %v724
        %802 = vmax.xlane.f32.xlu0 %v801
        %v803 = vpop.xlane.xlu0 %802
        %v804 = vmax.f32 %v728, %v730
        %805 = vmax.xlane.f32.xlu0 %v804
        %v806 = vpop.xlane.xlu0 %805
        %v807 = vmax.f32 %v734, %v736
        %808 = vmax.xlane.f32.xlu0 %v807
        %v809 = vpop.xlane.xlu0 %808
        %v810 = vmax.f32 %v740, %v742
        %811 = vmax.xlane.f32.xlu0 %v810
        %v812 = vpop.xlane.xlu0 %811
        %v813 = vmax.f32 %v746, %v748
        %814 = vmax.xlane.f32.xlu0 %v813
        %v815 = vpop.xlane.xlu0 %814
        %v816 = vmax.f32 %v752, %v754
        %817 = vmax.xlane.f32.xlu0 %v816
        %v818 = vpop.xlane.xlu0 %817
        %v819 = vmax.f32 %v758, %v760
        %820 = vmax.xlane.f32.xlu0 %v819
        %v821 = vpop.xlane.xlu0 %820
        %v822 = vmax.f32 %v764, %v766
        %823 = vmax.xlane.f32.xlu0 %v822
        %v824 = vpop.xlane.xlu0 %823
        %v825 = vmax.f32 %v770, %v772
        %826 = vmax.xlane.f32.xlu0 %v825
        %v827 = vpop.xlane.xlu0 %826
        %v828 = vmax.f32 %v776, %v778
        %829 = vmax.xlane.f32.xlu0 %v828
        %v830 = vpop.xlane.xlu0 %829
        %v831 = vmax.f32 %v782, %v784
        %832 = vmax.xlane.f32.xlu0 %v831
        %v833 = vpop.xlane.xlu0 %832
        %v834 = vsub.f32 %v692, %v788
        %v835 = vsub.f32 %v694, %v788
        %v836 = vsub.f32 %v698, %v791
        %v837 = vsub.f32 %v700, %v791
        %v838 = vsub.f32 %v704, %v794
        %v839 = vsub.f32 %v706, %v794
        %v840 = vsub.f32 %v710, %v797
        %v841 = vsub.f32 %v712, %v797
        %v842 = vsub.f32 %v716, %v800
        %v843 = vsub.f32 %v718, %v800
        %v844 = vsub.f32 %v722, %v803
        %v845 = vsub.f32 %v724, %v803
        %v846 = vsub.f32 %v728, %v806
        %v847 = vsub.f32 %v730, %v806
        %v848 = vsub.f32 %v734, %v809
        %v849 = vsub.f32 %v736, %v809
        %v850 = vsub.f32 %v740, %v812
        %v851 = vsub.f32 %v742, %v812
        %v852 = vsub.f32 %v746, %v815
        %v853 = vsub.f32 %v748, %v815
        %v854 = vsub.f32 %v752, %v818
        %v855 = vsub.f32 %v754, %v818
        %v856 = vsub.f32 %v758, %v821
        %v857 = vsub.f32 %v760, %v821
        %v858 = vsub.f32 %v764, %v824
        %v859 = vsub.f32 %v766, %v824
        %v860 = vsub.f32 %v770, %v827
        %v861 = vsub.f32 %v772, %v827
        %v862 = vsub.f32 %v776, %v830
        %v863 = vsub.f32 %v778, %v830
        %v864 = vsub.f32 %v782, %v833
        %v865 = vsub.f32 %v784, %v833
        %v866 = vpack.c.bf16 %v836, %v834
        %v867 = vpack.c.bf16 %v837, %v835
        %v868 = vpack.c.bf16 %v840, %v838
        %v869 = vpack.c.bf16 %v841, %v839
        %v870 = vpack.c.bf16 %v844, %v842
        %v871 = vpack.c.bf16 %v845, %v843
        %v872 = vpack.c.bf16 %v848, %v846
        %v873 = vpack.c.bf16 %v849, %v847
        %v874 = vpack.c.bf16 %v852, %v850
        %v875 = vpack.c.bf16 %v853, %v851
        %v876 = vpack.c.bf16 %v856, %v854
        %v877 = vpack.c.bf16 %v857, %v855
        %v878 = vpack.c.bf16 %v860, %v858
        %v879 = vpack.c.bf16 %v861, %v859
        %v880 = vpack.c.bf16 %v864, %v862
        %v881 = vpack.c.bf16 %v865, %v863
        %v883 = vmul.bf16 %v866, 1069105081
        %v884 = vpow.bf16.pop %v883
        %v886 = vmul.bf16 %v867, 1069105081
        %v887 = vpow.bf16.pop %v886
        %v889 = vmul.bf16 %v868, 1069105081
        %v890 = vpow.bf16.pop %v889
        %v892 = vmul.bf16 %v869, 1069105081
        %v893 = vpow.bf16.pop %v892
        %v895 = vmul.bf16 %v870, 1069105081
        %v896 = vpow.bf16.pop %v895
        %v898 = vmul.bf16 %v871, 1069105081
        %v899 = vpow.bf16.pop %v898
        %v901 = vmul.bf16 %v872, 1069105081
        %v902 = vpow.bf16.pop %v901
        %v904 = vmul.bf16 %v873, 1069105081
        %v905 = vpow.bf16.pop %v904
        %v907 = vmul.bf16 %v874, 1069105081
        %v908 = vpow.bf16.pop %v907
        %v910 = vmul.bf16 %v875, 1069105081
        %v911 = vpow.bf16.pop %v910
        %v913 = vmul.bf16 %v876, 1069105081
        %v914 = vpow.bf16.pop %v913
        %v916 = vmul.bf16 %v877, 1069105081
        %v917 = vpow.bf16.pop %v916
        %v919 = vmul.bf16 %v878, 1069105081
        %v920 = vpow.bf16.pop %v919
        %v922 = vmul.bf16 %v879, 1069105081
        %v923 = vpow.bf16.pop %v922
        %v925 = vmul.bf16 %v880, 1069105081
        %v926 = vpow.bf16.pop %v925
        %v928 = vmul.bf16 %v881, 1069105081
        %v929 = vpow.bf16.pop %v928
        %930 = vmatprep.subr.bf16.mxu0 0
        %931 = vmatpush1.bf16.msra.mxu0 1065369472
        %932 = vmatprep.subr.bf16.mxu0 0
        %933 = vmatpush1.bf16.msra.mxu0 1065369472
        %934 = vmatprep.subr.bf16.mxu0 0
        %935 = vmatpush1.bf16.msra.mxu0 1065369472
        %936 = vmatprep.subr.bf16.mxu0 0
        %937 = vmatpush1.bf16.msra.mxu0 1065369472
        %938 = vmatprep.subr.bf16.mxu0 0
        %939 = vmatpush1.bf16.msra.mxu0 1065369472
        %940 = vmatprep.subr.bf16.mxu0 0
        %941 = vmatpush1.bf16.msra.mxu0 1065369472
        %942 = vmatprep.subr.bf16.mxu0 0
        %943 = vmatpush1.bf16.msra.mxu0 1065369472
        %944 = vmatprep.subr.bf16.mxu0 0
        %945 = vmatpush1.bf16.msra.mxu0 1065369472
        %946 = vmatprep.subr.bf16.mxu0 0
        %947 = vmatpush1.bf16.msra.mxu0 1065369472
        %948 = vmatprep.subr.bf16.mxu0 0
        %949 = vmatpush1.bf16.msra.mxu0 1065369472
        %950 = vmatprep.subr.bf16.mxu0 0
        %951 = vmatpush1.bf16.msra.mxu0 1065369472
        %952 = vmatprep.subr.bf16.mxu0 0
        %953 = vmatpush1.bf16.msra.mxu0 1065369472
        %954 = vmatprep.subr.bf16.mxu0 0
        %955 = vmatpush1.bf16.msra.mxu0 1065369472
        %956 = vmatprep.subr.bf16.mxu0 0
        %957 = vmatpush1.bf16.msra.mxu0 1065369472
        %958 = vmatprep.subr.bf16.mxu0 0
        %959 = vmatpush1.bf16.msra.mxu0 1065369472
        %960 = vmatprep.subr.bf16.mxu0 0
        %961 = vmatpush1.bf16.msra.mxu0 1065369472
        %962 = vmatprep.mubr.bf16.mxu0 %v887
        %963 = vmatmul.mubr.bf16.gmra.mrb[0].mxu0 %v884
        %v964 = vpop.f32.mrb[0].mxu0
        %v965 = vadd.f32 0.0, %v964
        %v966 = vpop.f32.mrb[0].mxu0
        %v967 = vpop.f32.mrb[0].mxu0
        %v968 = vadd.f32 0.0, %v967
        %v969 = vpop.f32.mrb[0].mxu0
        %970 = vmatprep.mubr.bf16.mxu0 %v893
        %971 = vmatmul.mubr.bf16.gmra.mrb[0].mxu0 %v890
        %v972 = vpop.f32.mrb[0].mxu0
        %v973 = vadd.f32 0.0, %v972
        %v974 = vpop.f32.mrb[0].mxu0
        %v975 = vpop.f32.mrb[0].mxu0
        %v976 = vadd.f32 0.0, %v975
        %v977 = vpop.f32.mrb[0].mxu0
        %978 = vmatprep.mubr.bf16.mxu0 %v899
        %979 = vmatmul.mubr.bf16.gmra.mrb[0].mxu0 %v896
        %v980 = vpop.f32.mrb[0].mxu0
        %v981 = vadd.f32 0.0, %v980
        %v982 = vpop.f32.mrb[0].mxu0
        %v983 = vpop.f32.mrb[0].mxu0
        %v984 = vadd.f32 0.0, %v983
        %v985 = vpop.f32.mrb[0].mxu0
        %986 = vmatprep.mubr.bf16.mxu0 %v905
        %987 = vmatmul.mubr.bf16.gmra.mrb[0].mxu0 %v902
        %v988 = vpop.f32.mrb[0].mxu0
        %v989 = vadd.f32 0.0, %v988
        %v990 = vpop.f32.mrb[0].mxu0
        %v991 = vpop.f32.mrb[0].mxu0
        %v992 = vadd.f32 0.0, %v991
        %v993 = vpop.f32.mrb[0].mxu0
        %994 = vmatprep.mubr.bf16.mxu0 %v911
        %995 = vmatmul.mubr.bf16.gmra.mrb[0].mxu0 %v908
        %v996 = vpop.f32.mrb[0].mxu0
        %v997 = vadd.f32 0.0, %v996
        %v998 = vpop.f32.mrb[0].mxu0
        %v999 = vpop.f32.mrb[0].mxu0
        %v1000 = vadd.f32 0.0, %v999
        %v1001 = vpop.f32.mrb[0].mxu0
        %1002 = vmatprep.mubr.bf16.mxu0 %v917
        %1003 = vmatmul.mubr.bf16.gmra.mrb[0].mxu0 %v914
        %v1004 = vpop.f32.mrb[0].mxu0
        %v1005 = vadd.f32 0.0, %v1004
        %v1006 = vpop.f32.mrb[0].mxu0
        %v1007 = vpop.f32.mrb[0].mxu0
        %v1008 = vadd.f32 0.0, %v1007
        %v1009 = vpop.f32.mrb[0].mxu0
        %1010 = vmatprep.mubr.bf16.mxu0 %v923
        %1011 = vmatmul.mubr.bf16.gmra.mrb[0].mxu0 %v920
        %v1012 = vpop.f32.mrb[0].mxu0
        %v1013 = vadd.f32 0.0, %v1012
        %v1014 = vpop.f32.mrb[0].mxu0
        %v1015 = vpop.f32.mrb[0].mxu0
        %v1016 = vadd.f32 0.0, %v1015
        %v1017 = vpop.f32.mrb[0].mxu0
        %1018 = vmatprep.mubr.bf16.mxu0 %v929
        %1019 = vmatmul.mubr.bf16.gmra.mrb[0].mxu0 %v926
        %v1020 = vpop.f32.mrb[0].mxu0
        %v1021 = vadd.f32 0.0, %v1020
        %v1022 = vpop.f32.mrb[0].mxu0
        %v1023 = vpop.f32.mrb[0].mxu0
        %v1024 = vadd.f32 0.0, %v1023
        %v1025 = vpop.f32.mrb[0].mxu0
        %1026 = vdwg.mxu0
        %v1027 = vrcp.pop %v965
        %v1028 = vrcp.pop %v968
        %v1029 = vrcp.pop %v973
        %v1030 = vrcp.pop %v976
        %v1031 = vrcp.pop %v981
        %v1032 = vrcp.pop %v984
        %v1033 = vrcp.pop %v989
        %v1034 = vrcp.pop %v992
        %v1035 = vrcp.pop %v997
        %v1036 = vrcp.pop %v1000
        %v1037 = vrcp.pop %v1005
        %v1038 = vrcp.pop %v1008
        %v1039 = vrcp.pop %v1013
        %v1040 = vrcp.pop %v1016
        %v1041 = vrcp.pop %v1021
        %v1042 = vrcp.pop %v1024
        %v1043 = vld [vmem:[#allocation13] sm:$0xff]
        %v1044 = vld [vmem:[#allocation13 + $0x8] sm:$0xff]
        %v1045 = vld [vmem:[#allocation13 + $0x10] sm:$0xff]
        %v1046 = vld [vmem:[#allocation13 + $0x18] sm:$0xff]
        %v1047 = vld [vmem:[%s4] sm:$0x1]
        %v1049 = vlaneseq
        %v1050 = vshrl.u32 %v1049, 7
        %v1051 = vsub.s32 0, %v1050
        %v1052 = vrot.slane %v1047, %v1051
        %1054 = vxpose.xlu0.b32.start [1/16] %v424, 128
        %1055 = vxpose.xlu0.b32.cont [2/16] %v425, 128
        %1056 = vxpose.xlu0.b32.cont [3/16] %v426, 128
        %1057 = vxpose.xlu0.b32.cont [4/16] %v427, 128
        %1058 = vxpose.xlu0.b32.cont [5/16] 0.0, 128
        %1059 = vxpose.xlu0.b32.cont [6/16] 0.0, 128
        %1060 = vxpose.xlu0.b32.cont [7/16] 0.0, 128
        %1061 = vxpose.xlu0.b32.cont [8/16] 0.0, 128
        %1062 = vxpose.xlu0.b32.cont [9/16] 0.0, 128
        %1063 = vxpose.xlu0.b32.cont [10/16] 0.0, 128
        %1064 = vxpose.xlu0.b32.cont [11/16] 0.0, 128
        %1065 = vxpose.xlu0.b32.cont [12/16] 0.0, 128
        %1066 = vxpose.xlu0.b32.cont [13/16] 0.0, 128
        %1067 = vxpose.xlu0.b32.cont [14/16] 0.0, 128
        %1068 = vxpose.xlu0.b32.cont [15/16] 0.0, 128
        %1069 = vxpose.xlu0.b32.end [16/16] 0.0, 128
        %v1070 = vpop.trf.xlu0
        %v1071 = vpop.trf.xlu0
        %v1072 = vpop.trf.xlu0
        %v1073 = vpop.trf.xlu0
        %v1074 = vpop.trf.xlu0
        %v1075 = vpop.trf.xlu0
        %v1076 = vpop.trf.xlu0
        %v1077 = vpop.trf.xlu0
        %v1078 = vpop.trf.xlu0
        %v1079 = vpop.trf.xlu0
        %v1080 = vpop.trf.xlu0
        %v1081 = vpop.trf.xlu0
        %v1082 = vpop.trf.xlu0
        %v1083 = vpop.trf.xlu0
        %v1084 = vpop.trf.xlu0
        %v1085 = vpop.trf.xlu0
        %v1087 = vsel %vm532, %v1070, 0
        %v1090 = vsel %vm532, %v1071, 0
        %v1093 = vsel %vm532, %v1072, 0
        %v1096 = vsel %vm532, %v1073, 0
        %v1099 = vsel %vm532, %v1074, 0
        %v1102 = vsel %vm532, %v1075, 0
        %v1105 = vsel %vm532, %v1076, 0
        %v1108 = vsel %vm532, %v1077, 0
        %v1111 = vsel %vm532, %v1078, 0
        %v1114 = vsel %vm532, %v1079, 0
        %v1117 = vsel %vm532, %v1080, 0
        %v1120 = vsel %vm532, %v1081, 0
        %v1123 = vsel %vm532, %v1082, 0
        %v1126 = vsel %vm532, %v1083, 0
        %v1129 = vsel %vm532, %v1084, 0
        %v1132 = vsel %vm532, %v1085, 0
        %v1135 = vsel %vm532, %v1043, 0
        %v1138 = vsel %vm532, %v1044, 0
        %v1141 = vsel %vm532, %v1045, 0
        %v1144 = vsel %vm532, %v1046, 0
        %1146 = vmatprep.subr.mxu0 0.0
        %1147 = vmatpush1.xpose.msra.mxu0 %v1135
        %1148 = vmatprep.subr.mxu0 0.0
        %1149 = vmatpush1.xpose.msra.mxu0 %v1138
        %1150 = vmatprep.subr.mxu0 0.0
        %1151 = vmatpush1.xpose.msra.mxu0 %v1141
        %1152 = vmatprep.subr.mxu0 0.0
        %1153 = vmatpush1.xpose.msra.mxu0 %v1144
        %1154 = vmatprep.subr.mxu0 0.0
        %1155 = vmatpush1.xpose.msra.mxu0 0.0
        %1156 = vmatprep.subr.mxu0 0.0
        %1157 = vmatpush1.xpose.msra.mxu0 0.0
        %1158 = vmatprep.subr.mxu0 0.0
        %1159 = vmatpush1.xpose.msra.mxu0 0.0
        %1160 = vmatprep.subr.mxu0 0.0
        %1161 = vmatpush1.xpose.msra.mxu0 0.0
        %1162 = vmatprep.subr.mxu0 0.0
        %1163 = vmatpush1.xpose.msra.mxu0 0.0
        %1164 = vmatprep.subr.mxu0 0.0
        %1165 = vmatpush1.xpose.msra.mxu0 0.0
        %1166 = vmatprep.subr.mxu0 0.0
        %1167 = vmatpush1.xpose.msra.mxu0 0.0
        %1168 = vmatprep.subr.mxu0 0.0
        %1169 = vmatpush1.xpose.msra.mxu0 0.0
        %1170 = vmatprep.subr.mxu0 0.0
        %1171 = vmatpush1.xpose.msra.mxu0 0.0
        %1172 = vmatprep.subr.mxu0 0.0
        %1173 = vmatpush1.xpose.msra.mxu0 0.0
        %1174 = vmatprep.subr.mxu0 0.0
        %1175 = vmatpush1.xpose.msra.mxu0 0.0
        %1176 = vmatprep.subr.mxu0 0.0
        %1177 = vmatpush1.xpose.msra.mxu0 0.0
        %1178 = vmatprep.subr.mxu0 0.0
        %1179 = vmatpush1.xpose.msra.mxu0 0.0
        %1180 = vmatprep.subr.mxu0 0.0
        %1181 = vmatpush1.xpose.msra.mxu0 0.0
        %1182 = vmatprep.subr.mxu0 0.0
        %1183 = vmatpush1.xpose.msra.mxu0 0.0
        %1184 = vmatprep.subr.mxu0 0.0
        %1185 = vmatpush1.xpose.msra.mxu0 0.0
        %1186 = vmatprep.subr.mxu0 0.0
        %1187 = vmatpush1.xpose.msra.mxu0 0.0
        %1188 = vmatprep.subr.mxu0 0.0
        %1189 = vmatpush1.xpose.msra.mxu0 0.0
        %1190 = vmatprep.subr.mxu0 0.0
        %1191 = vmatpush1.xpose.msra.mxu0 0.0
        %1192 = vmatprep.subr.mxu0 0.0
        %1193 = vmatpush1.xpose.msra.mxu0 0.0
        %1194 = vmatprep.subr.mxu0 0.0
        %1195 = vmatpush1.xpose.msra.mxu0 0.0
        %1196 = vmatprep.subr.mxu0 0.0
        %1197 = vmatpush1.xpose.msra.mxu0 0.0
        %1198 = vmatprep.subr.mxu0 0.0
        %1199 = vmatpush1.xpose.msra.mxu0 0.0
        %1200 = vmatprep.subr.mxu0 0.0
        %1201 = vmatpush1.xpose.msra.mxu0 0.0
        %1202 = vmatprep.subr.mxu0 0.0
        %1203 = vmatpush1.xpose.msra.mxu0 0.0
        %1204 = vmatprep.subr.mxu0 0.0
        %1205 = vmatpush1.xpose.msra.mxu0 0.0
        %1206 = vmatprep.subr.mxu0 0.0
        %1207 = vmatpush1.xpose.msra.mxu0 0.0
        %1208 = vmatprep.subr.mxu0 0.0
        %1209 = vmatpush1.xpose.msra.mxu0 0.0
        %1210 = vmatprep.mubr.f32.mxu0 0.0
        %1211 = vmatmul.mubr.f32.gmra.mrb[0].mxu0 %v1087
        %v1212 = vpop.f32.mrb[0].mxu0
        %v1213 = vadd.f32 %v1052, %v1212
        %v1214 = vpop.f32.mrb[0].mxu0
        %1215 = vmatprep.mubr.f32.mxu0 0.0
        %1216 = vmatmul.mubr.f32.gmra.mrb[0].mxu0 %v1090
        %v1217 = vpop.f32.mrb[0].mxu0
        %v1218 = vadd.f32 %v1052, %v1217
        %v1219 = vpop.f32.mrb[0].mxu0
        %1220 = vmatprep.mubr.f32.mxu0 0.0
        %1221 = vmatmul.mubr.f32.gmra.mrb[0].mxu0 %v1093
        %v1222 = vpop.f32.mrb[0].mxu0
        %v1223 = vadd.f32 %v1052, %v1222
        %v1224 = vpop.f32.mrb[0].mxu0
        %1225 = vmatprep.mubr.f32.mxu0 0.0
        %1226 = vmatmul.mubr.f32.gmra.mrb[0].mxu0 %v1096
        %v1227 = vpop.f32.mrb[0].mxu0
        %v1228 = vadd.f32 %v1052, %v1227
        %v1229 = vpop.f32.mrb[0].mxu0
        %1230 = vmatprep.mubr.f32.mxu0 0.0
        %1231 = vmatmul.mubr.f32.gmra.mrb[0].mxu0 %v1099
        %v1232 = vpop.f32.mrb[0].mxu0
        %v1233 = vadd.f32 %v1052, %v1232
        %v1234 = vpop.f32.mrb[0].mxu0
        %1235 = vmatprep.mubr.f32.mxu0 0.0
        %1236 = vmatmul.mubr.f32.gmra.mrb[0].mxu0 %v1102
        %v1237 = vpop.f32.mrb[0].mxu0
        %v1238 = vadd.f32 %v1052, %v1237
        %v1239 = vpop.f32.mrb[0].mxu0
        %1240 = vmatprep.mubr.f32.mxu0 0.0
        %1241 = vmatmul.mubr.f32.gmra.mrb[0].mxu0 %v1105
        %v1242 = vpop.f32.mrb[0].mxu0
        %v1243 = vadd.f32 %v1052, %v1242
        %v1244 = vpop.f32.mrb[0].mxu0
        %1245 = vmatprep.mubr.f32.mxu0 0.0
        %1246 = vmatmul.mubr.f32.gmra.mrb[0].mxu0 %v1108
        %v1247 = vpop.f32.mrb[0].mxu0
        %v1248 = vadd.f32 %v1052, %v1247
        %v1249 = vpop.f32.mrb[0].mxu0
        %1250 = vmatprep.mubr.f32.mxu0 0.0
        %1251 = vmatmul.mubr.f32.gmra.mrb[0].mxu0 %v1111
        %v1252 = vpop.f32.mrb[0].mxu0
        %v1253 = vadd.f32 %v1052, %v1252
        %v1254 = vpop.f32.mrb[0].mxu0
        %1255 = vmatprep.mubr.f32.mxu0 0.0
        %1256 = vmatmul.mubr.f32.gmra.mrb[0].mxu0 %v1114
        %v1257 = vpop.f32.mrb[0].mxu0
        %v1258 = vadd.f32 %v1052, %v1257
        %v1259 = vpop.f32.mrb[0].mxu0
        %1260 = vmatprep.mubr.f32.mxu0 0.0
        %1261 = vmatmul.mubr.f32.gmra.mrb[0].mxu0 %v1117
        %v1262 = vpop.f32.mrb[0].mxu0
        %v1263 = vadd.f32 %v1052, %v1262
        %v1264 = vpop.f32.mrb[0].mxu0
        %1265 = vmatprep.mubr.f32.mxu0 0.0
        %1266 = vmatmul.mubr.f32.gmra.mrb[0].mxu0 %v1120
        %v1267 = vpop.f32.mrb[0].mxu0
        %v1268 = vadd.f32 %v1052, %v1267
        %v1269 = vpop.f32.mrb[0].mxu0
        %1270 = vmatprep.mubr.f32.mxu0 0.0
        %1271 = vmatmul.mubr.f32.gmra.mrb[0].mxu0 %v1123
        %v1272 = vpop.f32.mrb[0].mxu0
        %v1273 = vadd.f32 %v1052, %v1272
        %v1274 = vpop.f32.mrb[0].mxu0
        %1275 = vmatprep.mubr.f32.mxu0 0.0
        %1276 = vmatmul.mubr.f32.gmra.mrb[0].mxu0 %v1126
        %v1277 = vpop.f32.mrb[0].mxu0
        %v1278 = vadd.f32 %v1052, %v1277
        %v1279 = vpop.f32.mrb[0].mxu0
        %1280 = vmatprep.mubr.f32.mxu0 0.0
        %1281 = vmatmul.mubr.f32.gmra.mrb[0].mxu0 %v1129
        %v1282 = vpop.f32.mrb[0].mxu0
        %v1283 = vadd.f32 %v1052, %v1282
        %v1284 = vpop.f32.mrb[0].mxu0
        %1285 = vmatprep.mubr.f32.mxu0 0.0
        %1286 = vmatmul.mubr.f32.gmra.mrb[0].mxu0 %v1132
        %v1287 = vpop.f32.mrb[0].mxu0
        %v1288 = vadd.f32 %v1052, %v1287
        %v1289 = vpop.f32.mrb[0].mxu0
        %1290 = vdwg.mxu0
        %1292 = vset.pattern.permute.xlu0 0
        %1293 = vperm.xlu0 %1292, %v1027
        %v1294 = vpop.permute.xlu0 %1293
        %1297 = vset.pattern.permute.xlu0 0
        %1298 = vperm.xlu0 %1297, %v1028
        %v1299 = vpop.permute.xlu0 %1298
        %1302 = vset.pattern.permute.xlu0 0
        %1303 = vperm.xlu0 %1302, %v1029
        %v1304 = vpop.permute.xlu0 %1303
        %1307 = vset.pattern.permute.xlu0 0
        %1308 = vperm.xlu0 %1307, %v1030
        %v1309 = vpop.permute.xlu0 %1308
        %1312 = vset.pattern.permute.xlu0 0
        %1313 = vperm.xlu0 %1312, %v1031
        %v1314 = vpop.permute.xlu0 %1313
        %1317 = vset.pattern.permute.xlu0 0
        %1318 = vperm.xlu0 %1317, %v1032
        %v1319 = vpop.permute.xlu0 %1318
        %1322 = vset.pattern.permute.xlu0 0
        %1323 = vperm.xlu0 %1322, %v1033
        %v1324 = vpop.permute.xlu0 %1323
        %1327 = vset.pattern.permute.xlu0 0
        %1328 = vperm.xlu0 %1327, %v1034
        %v1329 = vpop.permute.xlu0 %1328
        %1332 = vset.pattern.permute.xlu0 0
        %1333 = vperm.xlu0 %1332, %v1035
        %v1334 = vpop.permute.xlu0 %1333
        %1337 = vset.pattern.permute.xlu0 0
        %1338 = vperm.xlu0 %1337, %v1036
        %v1339 = vpop.permute.xlu0 %1338
        %1342 = vset.pattern.permute.xlu0 0
        %1343 = vperm.xlu0 %1342, %v1037
        %v1344 = vpop.permute.xlu0 %1343
        %1347 = vset.pattern.permute.xlu0 0
        %1348 = vperm.xlu0 %1347, %v1038
        %v1349 = vpop.permute.xlu0 %1348
        %1352 = vset.pattern.permute.xlu0 0
        %1353 = vperm.xlu0 %1352, %v1039
        %v1354 = vpop.permute.xlu0 %1353
        %1357 = vset.pattern.permute.xlu0 0
        %1358 = vperm.xlu0 %1357, %v1040
        %v1359 = vpop.permute.xlu0 %1358
        %1362 = vset.pattern.permute.xlu0 0
        %1363 = vperm.xlu0 %1362, %v1041
        %v1364 = vpop.permute.xlu0 %1363
        %1367 = vset.pattern.permute.xlu0 0
        %1368 = vperm.xlu0 %1367, %v1042
        %v1369 = vpop.permute.xlu0 %1368
        %v1371 = vmul.f32 %v1213, %v1294
        %v1372 = vmul.f32 %v1218, %v1299
        %v1373 = vmul.f32 %v1223, %v1304
        %v1374 = vmul.f32 %v1228, %v1309
        %v1375 = vmul.f32 %v1233, %v1314
        %v1376 = vmul.f32 %v1238, %v1319
        %v1377 = vmul.f32 %v1243, %v1324
        %v1378 = vmul.f32 %v1248, %v1329
        %v1379 = vmul.f32 %v1253, %v1334
        %v1380 = vmul.f32 %v1258, %v1339
        %v1381 = vmul.f32 %v1263, %v1344
        %v1382 = vmul.f32 %v1268, %v1349
        %v1383 = vmul.f32 %v1273, %v1354
        %v1384 = vmul.f32 %v1278, %v1359
        %v1385 = vmul.f32 %v1283, %v1364
        %v1386 = vmul.f32 %v1288, %v1369
        %v1387 = vpack.c.bf16 %v1372, %v1371
        %v1388 = vpack.c.bf16 %v1374, %v1373
        %v1389 = vpack.c.bf16 %v1376, %v1375
        %v1390 = vpack.c.bf16 %v1378, %v1377
        %v1391 = vpack.c.bf16 %v1380, %v1379
        %v1392 = vpack.c.bf16 %v1382, %v1381
        %v1393 = vpack.c.bf16 %v1384, %v1383
        %v1394 = vpack.c.bf16 %v1386, %v1385
        %v1395 = vld [vmem:[#allocation2] sm:$0xff]
        %v1396 = vld [vmem:[#allocation2 + $0x8] sm:$0xff]
        %v1397 = vld [vmem:[#allocation2 + $0x10] sm:$0xff]
        %v1398 = vld [vmem:[#allocation2 + $0x18] sm:$0xff]
        %v1399 = vld [vmem:[#allocation2 + $0x20] sm:$0xff]
        %v1400 = vld [vmem:[#allocation2 + $0x28] sm:$0xff]
        %v1401 = vld [vmem:[#allocation2 + $0x30] sm:$0xff]
        %v1402 = vld [vmem:[#allocation2 + $0x38] sm:$0xff]
        %1403 = vxpose.xlu0.c.b16.start [1/8] %v1387, 128
        %1404 = vxpose.xlu0.c.b16.cont [2/8] %v1388, 128
        %1405 = vxpose.xlu0.c.b16.cont [3/8] %v1389, 128
        %1406 = vxpose.xlu0.c.b16.cont [4/8] %v1390, 128
        %1407 = vxpose.xlu0.c.b16.cont [5/8] %v1391, 128
        %1408 = vxpose.xlu0.c.b16.cont [6/8] %v1392, 128
        %1409 = vxpose.xlu0.c.b16.cont [7/8] %v1393, 128
        %1410 = vxpose.xlu0.c.b16.end [8/8] %v1394, 128
        %v1411 = vpop.trf.xlu0
        %v1412 = vpop.trf.xlu0
        %v1413 = vpop.trf.xlu0
        %v1414 = vpop.trf.xlu0
        %v1415 = vpop.trf.xlu0
        %v1416 = vpop.trf.xlu0
        %v1417 = vpop.trf.xlu0
        %v1418 = vpop.trf.xlu0
        %1419 = vmatprep.subr.bf16.mxu0 %v887
        %1420 = vmatpush1.bf16.msra.mxu0 %v884
        %1421 = vmatprep.subr.bf16.mxu0 %v893
        %1422 = vmatpush1.bf16.msra.mxu0 %v890
        %1423 = vmatprep.subr.bf16.mxu0 %v899
        %1424 = vmatpush1.bf16.msra.mxu0 %v896
        %1425 = vmatprep.subr.bf16.mxu0 %v905
        %1426 = vmatpush1.bf16.msra.mxu0 %v902
        %1427 = vmatprep.subr.bf16.mxu0 %v911
        %1428 = vmatpush1.bf16.msra.mxu0 %v908
        %1429 = vmatprep.subr.bf16.mxu0 %v917
        %1430 = vmatpush1.bf16.msra.mxu0 %v914
        %1431 = vmatprep.subr.bf16.mxu0 %v923
        %1432 = vmatpush1.bf16.msra.mxu0 %v920
        %1433 = vmatprep.subr.bf16.mxu0 %v929
        %1434 = vmatpush1.bf16.msra.mxu0 %v926
        %1435 = vmatprep.subr.bf16.mxu0 0
        %1436 = vmatpush1.bf16.msra.mxu0 0
        %1437 = vmatprep.subr.bf16.mxu0 0
        %1438 = vmatpush1.bf16.msra.mxu0 0
        %1439 = vmatprep.subr.bf16.mxu0 0
        %1440 = vmatpush1.bf16.msra.mxu0 0
        %1441 = vmatprep.subr.bf16.mxu0 0
        %1442 = vmatpush1.bf16.msra.mxu0 0
        %1443 = vmatprep.subr.bf16.mxu0 0
        %1444 = vmatpush1.bf16.msra.mxu0 0
        %1445 = vmatprep.subr.bf16.mxu0 0
        %1446 = vmatpush1.bf16.msra.mxu0 0
        %1447 = vmatprep.subr.bf16.mxu0 0
        %1448 = vmatpush1.bf16.msra.mxu0 0
        %1449 = vmatprep.subr.bf16.mxu0 0
        %1450 = vmatpush1.bf16.msra.mxu0 0
        %1451 = vmatprep.mubr.bf16.mxu0 0
        %1452 = vmatmul.mubr.bf16.gmra.mrb[0].mxu0 %v1411
        %v1453 = vpop.f32.mrb[0].mxu0
        %v1454 = vadd.f32 0.0, %v1453
        %v1455 = vpop.f32.mrb[0].mxu0
        %v1456 = vadd.f32 0.0, %v1455
        %v1457 = vpop.f32.mrb[0].mxu0
        %v1458 = vadd.f32 0.0, %v1457
        %v1459 = vpop.f32.mrb[0].mxu0
        %v1460 = vadd.f32 0.0, %v1459
        %1461 = vmatprep.mubr.bf16.mxu0 0
        %1462 = vmatmul.mubr.bf16.gmra.mrb[0].mxu0 %v1412
        %v1463 = vpop.f32.mrb[0].mxu0
        %v1464 = vadd.f32 0.0, %v1463
        %v1465 = vpop.f32.mrb[0].mxu0
        %v1466 = vadd.f32 0.0, %v1465
        %v1467 = vpop.f32.mrb[0].mxu0
        %v1468 = vadd.f32 0.0, %v1467
        %v1469 = vpop.f32.mrb[0].mxu0
        %v1470 = vadd.f32 0.0, %v1469
        %1471 = vdwg.mxu0
        %v1472 = vadd.f32 %v1395, %v1454
        %v1473 = vadd.f32 %v1396, %v1456
        %v1474 = vadd.f32 %v1397, %v1458
        %v1475 = vadd.f32 %v1398, %v1460
        %v1476 = vadd.f32 %v1399, %v1464
        %v1477 = vadd.f32 %v1400, %v1466
        %v1478 = vadd.f32 %v1401, %v1468
        %v1479 = vadd.f32 %v1402, %v1470
        %1480 = vst [vmem:[#allocation2] sm:$0xff] %v1472
        %1481 = vst [vmem:[#allocation2 + $0x8] sm:$0xff] %v1473
        %1482 = vst [vmem:[#allocation2 + $0x10] sm:$0xff] %v1474
        %1483 = vst [vmem:[#allocation2 + $0x18] sm:$0xff] %v1475
        %1484 = vst [vmem:[#allocation2 + $0x20] sm:$0xff] %v1476
        %1485 = vst [vmem:[#allocation2 + $0x28] sm:$0xff] %v1477
        %1486 = vst [vmem:[#allocation2 + $0x30] sm:$0xff] %v1478
        %1487 = vst [vmem:[#allocation2 + $0x38] sm:$0xff] %v1479
        %p1488 = scmp.eq.s32.totalorder %s35, 1
        // Predicated region
        $region69: #{tpu_custom_call.1} parent=47 // pred_check
          %p1489 = pneg %p1488
        $region70: #{tpu_custom_call.1} parent=47 // pred_check_branch
          %1491 = sbr.rel (%p1489) target = $region72
        $region71: #{tpu_custom_call.1} parent=47 // pred_region
          %v1492 = vld [vmem:[#allocation3] sm:$0xff]
          %v1493 = vld [vmem:[#allocation3 + $0x8] sm:$0xff]
          %v1494 = vld [vmem:[#allocation3 + $0x10] sm:$0xff]
          %v1495 = vld [vmem:[#allocation3 + $0x18] sm:$0xff]
          %v1496 = vld [vmem:[#allocation3 + $0x20] sm:$0xff]
          %v1497 = vld [vmem:[#allocation3 + $0x28] sm:$0xff]
          %v1498 = vld [vmem:[#allocation3 + $0x30] sm:$0xff]
          %v1499 = vld [vmem:[#allocation3 + $0x38] sm:$0xff]
          %v1500 = vld [vmem:[#allocation4] sm:$0xff]
          %v1501 = vld [vmem:[#allocation4 + $0x8] sm:$0xff]
          %v1502 = vld [vmem:[#allocation4 + $0x10] sm:$0xff]
          %v1503 = vld [vmem:[#allocation4 + $0x18] sm:$0xff]
          %v1505 = vsel %vm532, %v1500, 0
          %v1508 = vsel %vm532, %v1501, 0
          %v1511 = vsel %vm532, %v1502, 0
          %v1514 = vsel %vm532, %v1503, 0
          %1516 = vmatprep.subr.mxu0 0.0
          %1517 = vmatpush1.msra.mxu0 %v1500
          %1518 = vmatprep.subr.mxu0 0.0
          %1519 = vmatpush1.msra.mxu0 %v1501
          %1520 = vmatprep.subr.mxu0 0.0
          %1521 = vmatpush1.msra.mxu0 %v1502
          %1522 = vmatprep.subr.mxu0 0.0
          %1523 = vmatpush1.msra.mxu0 %v1503
          %1524 = vmatprep.subr.mxu0 0.0
          %1525 = vmatpush1.msra.mxu0 0.0
          %1526 = vmatprep.subr.mxu0 0.0
          %1527 = vmatpush1.msra.mxu0 0.0
          %1528 = vmatprep.subr.mxu0 0.0
          %1529 = vmatpush1.msra.mxu0 0.0
          %1530 = vmatprep.subr.mxu0 0.0
          %1531 = vmatpush1.msra.mxu0 0.0
          %1532 = vmatprep.subr.mxu0 0.0
          %1533 = vmatpush1.msra.mxu0 0.0
          %1534 = vmatprep.subr.mxu0 0.0
          %1535 = vmatpush1.msra.mxu0 0.0
          %1536 = vmatprep.subr.mxu0 0.0
          %1537 = vmatpush1.msra.mxu0 0.0
          %1538 = vmatprep.subr.mxu0 0.0
          %1539 = vmatpush1.msra.mxu0 0.0
          %1540 = vmatprep.subr.mxu0 0.0
          %1541 = vmatpush1.msra.mxu0 0.0
          %1542 = vmatprep.subr.mxu0 0.0
          %1543 = vmatpush1.msra.mxu0 0.0
          %1544 = vmatprep.subr.mxu0 0.0
          %1545 = vmatpush1.msra.mxu0 0.0
          %1546 = vmatprep.subr.mxu0 0.0
          %1547 = vmatpush1.msra.mxu0 0.0
          %1548 = vmatprep.subr.mxu0 0.0
          %1549 = vmatpush1.msra.mxu0 0.0
          %1550 = vmatprep.subr.mxu0 0.0
          %1551 = vmatpush1.msra.mxu0 0.0
          %1552 = vmatprep.subr.mxu0 0.0
          %1553 = vmatpush1.msra.mxu0 0.0
          %1554 = vmatprep.subr.mxu0 0.0
          %1555 = vmatpush1.msra.mxu0 0.0
          %1556 = vmatprep.subr.mxu0 0.0
          %1557 = vmatpush1.msra.mxu0 0.0
          %1558 = vmatprep.subr.mxu0 0.0
          %1559 = vmatpush1.msra.mxu0 0.0
          %1560 = vmatprep.subr.mxu0 0.0
          %1561 = vmatpush1.msra.mxu0 0.0
          %1562 = vmatprep.subr.mxu0 0.0
          %1563 = vmatpush1.msra.mxu0 0.0
          %1564 = vmatprep.subr.mxu0 0.0
          %1565 = vmatpush1.msra.mxu0 0.0
          %1566 = vmatprep.subr.mxu0 0.0
          %1567 = vmatpush1.msra.mxu0 0.0
          %1568 = vmatprep.subr.mxu0 0.0
          %1569 = vmatpush1.msra.mxu0 0.0
          %1570 = vmatprep.subr.mxu0 0.0
          %1571 = vmatpush1.msra.mxu0 0.0
          %1572 = vmatprep.subr.mxu0 0.0
          %1573 = vmatpush1.msra.mxu0 0.0
          %1574 = vmatprep.subr.mxu0 0.0
          %1575 = vmatpush1.msra.mxu0 0.0
          %1576 = vmatprep.subr.mxu0 0.0
          %1577 = vmatpush1.msra.mxu0 0.0
          %1578 = vmatprep.subr.mxu0 0.0
          %1579 = vmatpush1.msra.mxu0 0.0
          %1580 = vmatprep.mubr.f32.mxu0 0.0
          %1581 = vmatmul.mubr.f32.gmra.mrb[0].mxu0 %v1505
          %v1582 = vpop.f32.mrb[0].mxu0
          %v1583 = vadd.f32 0.0, %v1582
          %v1584 = vpop.f32.mrb[0].mxu0
          %1585 = vmatprep.mubr.f32.mxu0 0.0
          %1586 = vmatmul.mubr.f32.gmra.mrb[0].mxu0 %v1508
          %v1587 = vpop.f32.mrb[0].mxu0
          %v1588 = vadd.f32 0.0, %v1587
          %v1589 = vpop.f32.mrb[0].mxu0
          %1590 = vmatprep.mubr.f32.mxu0 0.0
          %1591 = vmatmul.mubr.f32.gmra.mrb[0].mxu0 %v1511
          %v1592 = vpop.f32.mrb[0].mxu0
          %v1593 = vadd.f32 0.0, %v1592
          %v1594 = vpop.f32.mrb[0].mxu0
          %1595 = vmatprep.mubr.f32.mxu0 0.0
          %1596 = vmatmul.mubr.f32.gmra.mrb[0].mxu0 %v1514
          %v1597 = vpop.f32.mrb[0].mxu0
          %v1598 = vadd.f32 0.0, %v1597
          %v1599 = vpop.f32.mrb[0].mxu0
          %1600 = vdwg.mxu0
          %v1601 = vsel %vm532, %v1583, -inf
          %1602 = vmax.xlane.f32.xlu0 %v1601
          %v1603 = vpop.xlane.xlu0 %1602
          %v1604 = vsel %vm532, %v1588, -inf
          %1605 = vmax.xlane.f32.xlu0 %v1604
          %v1606 = vpop.xlane.xlu0 %1605
          %v1607 = vsel %vm532, %v1593, -inf
          %1608 = vmax.xlane.f32.xlu0 %v1607
          %v1609 = vpop.xlane.xlu0 %1608
          %v1610 = vsel %vm532, %v1598, -inf
          %1611 = vmax.xlane.f32.xlu0 %v1610
          %v1612 = vpop.xlane.xlu0 %1611
          %v1613 = vsub.f32 %v1603, %v1583
          %v1614 = vsub.f32 %v1606, %v1588
          %v1615 = vsub.f32 %v1609, %v1593
          %v1616 = vsub.f32 %v1612, %v1598
          %v1617 = vsel %vm532, %v1613, -inf
          %1618 = vmax.xlane.f32.xlu0 %v1617
          %v1619 = vpop.xlane.xlu0 %1618
          %v1620 = vsel %vm532, %v1614, -inf
          %1621 = vmax.xlane.f32.xlu0 %v1620
          %v1622 = vpop.xlane.xlu0 %1621
          %v1623 = vsel %vm532, %v1615, -inf
          %1624 = vmax.xlane.f32.xlu0 %v1623
          %v1625 = vpop.xlane.xlu0 %1624
          %v1626 = vsel %vm532, %v1616, -inf
          %1627 = vmax.xlane.f32.xlu0 %v1626
          %v1628 = vpop.xlane.xlu0 %1627
          %v1629 = vsub.f32 %v1613, %v1619
          %v1630 = vsub.f32 %v1614, %v1622
          %v1631 = vsub.f32 %v1615, %v1625
          %v1632 = vsub.f32 %v1616, %v1628
          %v1633 = vmul.f32 %v1629, 1.442695
          %v1634 = vpow.pop %v1633
          %v1635 = vmul.f32 %v1630, 1.442695
          %v1636 = vpow.pop %v1635
          %v1637 = vmul.f32 %v1631, 1.442695
          %v1638 = vpow.pop %v1637
          %v1639 = vmul.f32 %v1632, 1.442695
          %v1640 = vpow.pop %v1639
          %v1641 = vsel %vm532, %v1634, 0.0
          %1642 = vadd.xlane.f32.xlu0 %v1641
          %v1643 = vpop.xlane.xlu0 %1642
          %v1644 = vsel %vm532, %v1636, 0.0
          %1645 = vadd.xlane.f32.xlu0 %v1644
          %v1646 = vpop.xlane.xlu0 %1645
          %v1647 = vsel %vm532, %v1638, 0.0
          %1648 = vadd.xlane.f32.xlu0 %v1647
          %v1649 = vpop.xlane.xlu0 %1648
          %v1650 = vsel %vm532, %v1640, 0.0
          %1651 = vadd.xlane.f32.xlu0 %v1650
          %v1652 = vpop.xlane.xlu0 %1651
          %v1653 = vrcp.pop %v1643
          %v1654 = vrcp.pop %v1646
          %v1655 = vrcp.pop %v1649
          %v1656 = vrcp.pop %v1652
          %v1657 = vmul.f32 %v1634, %v1653
          %v1658 = vmul.f32 %v1636, %v1654
          %v1659 = vmul.f32 %v1638, %v1655
          %v1660 = vmul.f32 %v1640, %v1656
          %v1662 = vsel %vm532, %v1657, 0
          %v1665 = vsel %vm532, %v1658, 0
          %v1668 = vsel %vm532, %v1659, 0
          %v1671 = vsel %vm532, %v1660, 0
          %1673 = vmatprep.subr.mxu0 %v1493
          %1674 = vmatpush1.msra.mxu0 %v1492
          %1675 = vmatprep.subr.mxu0 %v1495
          %1676 = vmatpush1.msra.mxu0 %v1494
          %1677 = vmatprep.subr.mxu0 %v1497
          %1678 = vmatpush1.msra.mxu0 %v1496
          %1679 = vmatprep.subr.mxu0 %v1499
          %1680 = vmatpush1.msra.mxu0 %v1498
          %1681 = vmatprep.subr.mxu0 0.0
          %1682 = vmatpush1.msra.mxu0 0.0
          %1683 = vmatprep.subr.mxu0 0.0
          %1684 = vmatpush1.msra.mxu0 0.0
          %1685 = vmatprep.subr.mxu0 0.0
          %1686 = vmatpush1.msra.mxu0 0.0
          %1687 = vmatprep.subr.mxu0 0.0
          %1688 = vmatpush1.msra.mxu0 0.0
          %1689 = vmatprep.subr.mxu0 0.0
          %1690 = vmatpush1.msra.mxu0 0.0
          %1691 = vmatprep.subr.mxu0 0.0
          %1692 = vmatpush1.msra.mxu0 0.0
          %1693 = vmatprep.subr.mxu0 0.0
          %1694 = vmatpush1.msra.mxu0 0.0
          %1695 = vmatprep.subr.mxu0 0.0
          %1696 = vmatpush1.msra.mxu0 0.0
          %1697 = vmatprep.subr.mxu0 0.0
          %1698 = vmatpush1.msra.mxu0 0.0
          %1699 = vmatprep.subr.mxu0 0.0
          %1700 = vmatpush1.msra.mxu0 0.0
          %1701 = vmatprep.subr.mxu0 0.0
          %1702 = vmatpush1.msra.mxu0 0.0
          %1703 = vmatprep.subr.mxu0 0.0
          %1704 = vmatpush1.msra.mxu0 0.0
          %1705 = vmatprep.subr.mxu0 0.0
          %1706 = vmatpush1.msra.mxu0 0.0
          %1707 = vmatprep.subr.mxu0 0.0
          %1708 = vmatpush1.msra.mxu0 0.0
          %1709 = vmatprep.subr.mxu0 0.0
          %1710 = vmatpush1.msra.mxu0 0.0
          %1711 = vmatprep.subr.mxu0 0.0
          %1712 = vmatpush1.msra.mxu0 0.0
          %1713 = vmatprep.subr.mxu0 0.0
          %1714 = vmatpush1.msra.mxu0 0.0
          %1715 = vmatprep.subr.mxu0 0.0
          %1716 = vmatpush1.msra.mxu0 0.0
          %1717 = vmatprep.subr.mxu0 0.0
          %1718 = vmatpush1.msra.mxu0 0.0
          %1719 = vmatprep.subr.mxu0 0.0
          %1720 = vmatpush1.msra.mxu0 0.0
          %1721 = vmatprep.subr.mxu0 0.0
          %1722 = vmatpush1.msra.mxu0 0.0
          %1723 = vmatprep.subr.mxu0 0.0
          %1724 = vmatpush1.msra.mxu0 0.0
          %1725 = vmatprep.subr.mxu0 0.0
          %1726 = vmatpush1.msra.mxu0 0.0
          %1727 = vmatprep.subr.mxu0 0.0
          %1728 = vmatpush1.msra.mxu0 0.0
          %1729 = vmatprep.subr.mxu0 0.0
          %1730 = vmatpush1.msra.mxu0 0.0
          %1731 = vmatprep.subr.mxu0 0.0
          %1732 = vmatpush1.msra.mxu0 0.0
          %1733 = vmatprep.subr.mxu0 0.0
          %1734 = vmatpush1.msra.mxu0 0.0
          %1735 = vmatprep.subr.mxu0 0.0
          %1736 = vmatpush1.msra.mxu0 0.0
          %1737 = vmatprep.mubr.f32.mxu0 0.0
          %1738 = vmatmul.mubr.f32.gmra.mrb[0].mxu0 %v1662
          %v1739 = vpop.f32.mrb[0].mxu0
          %v1740 = vadd.f32 0.0, %v1739
          %v1741 = vpop.f32.mrb[0].mxu0
          %v1742 = vadd.f32 0.0, %v1741
          %1743 = vmatprep.mubr.f32.mxu0 0.0
          %1744 = vmatmul.mubr.f32.gmra.mrb[0].mxu0 %v1665
          %v1745 = vpop.f32.mrb[0].mxu0
          %v1746 = vadd.f32 0.0, %v1745
          %v1747 = vpop.f32.mrb[0].mxu0
          %v1748 = vadd.f32 0.0, %v1747
          %1749 = vmatprep.mubr.f32.mxu0 0.0
          %1750 = vmatmul.mubr.f32.gmra.mrb[0].mxu0 %v1668
          %v1751 = vpop.f32.mrb[0].mxu0
          %v1752 = vadd.f32 0.0, %v1751
          %v1753 = vpop.f32.mrb[0].mxu0
          %v1754 = vadd.f32 0.0, %v1753
          %1755 = vmatprep.mubr.f32.mxu0 0.0
          %1756 = vmatmul.mubr.f32.gmra.mrb[0].mxu0 %v1671
          %v1757 = vpop.f32.mrb[0].mxu0
          %v1758 = vadd.f32 0.0, %v1757
          %v1759 = vpop.f32.mrb[0].mxu0
          %v1760 = vadd.f32 0.0, %v1759
          %1761 = vdwg.mxu0
          %s1762 = sld [smem:[#allocation5]]
          %v1763 = vld [vmem:[#allocation2] sm:$0xff]
          %v1764 = vld [vmem:[#allocation2 + $0x8] sm:$0xff]
          %v1765 = vld [vmem:[#allocation2 + $0x10] sm:$0xff]
          %v1766 = vld [vmem:[#allocation2 + $0x18] sm:$0xff]
          %v1767 = vld [vmem:[#allocation2 + $0x20] sm:$0xff]
          %v1768 = vld [vmem:[#allocation2 + $0x28] sm:$0xff]
          %v1769 = vld [vmem:[#allocation2 + $0x30] sm:$0xff]
          %v1770 = vld [vmem:[#allocation2 + $0x38] sm:$0xff]
          %v1771 = vstv %s1762
          %v1772 = vmul.f32 %v1771, %v1763
          %v1773 = vmul.f32 %v1771, %v1764
          %v1774 = vmul.f32 %v1771, %v1765
          %v1775 = vmul.f32 %v1771, %v1766
          %v1776 = vmul.f32 %v1771, %v1767
          %v1777 = vmul.f32 %v1771, %v1768
          %v1778 = vmul.f32 %v1771, %v1769
          %v1779 = vmul.f32 %v1771, %v1770
          %s1780 = sld [smem:[#allocation6]]
          %v1781 = vstv %s1780
          %v1782 = vmul.f32 %v1781, %v1740
          %v1783 = vmul.f32 %v1781, %v1742
          %v1784 = vmul.f32 %v1781, %v1746
          %v1785 = vmul.f32 %v1781, %v1748
          %v1786 = vmul.f32 %v1781, %v1752
          %v1787 = vmul.f32 %v1781, %v1754
          %v1788 = vmul.f32 %v1781, %v1758
          %v1789 = vmul.f32 %v1781, %v1760
          %v1790 = vadd.f32 %v1772, %v1782
          %v1791 = vadd.f32 %v1773, %v1783
          %v1792 = vadd.f32 %v1774, %v1784
          %v1793 = vadd.f32 %v1775, %v1785
          %v1794 = vadd.f32 %v1776, %v1786
          %v1795 = vadd.f32 %v1777, %v1787
          %v1796 = vadd.f32 %v1778, %v1788
          %v1797 = vadd.f32 %v1779, %v1789
          %v1798 = vmul.f32 %v1492, 3.0
          %v1799 = vmul.f32 %v1493, 3.0
          %v1800 = vmul.f32 %v1494, 3.0
          %v1801 = vmul.f32 %v1495, 3.0
          %v1802 = vmul.f32 %v1496, 3.0
          %v1803 = vmul.f32 %v1497, 3.0
          %v1804 = vmul.f32 %v1498, 3.0
          %v1805 = vmul.f32 %v1499, 3.0
          %v1806 = vadd.f32 %v1790, %v1798
          %v1807 = vadd.f32 %v1791, %v1799
          %v1808 = vadd.f32 %v1792, %v1800
          %v1809 = vadd.f32 %v1793, %v1801
          %v1810 = vadd.f32 %v1794, %v1802
          %v1811 = vadd.f32 %v1795, %v1803
          %v1812 = vadd.f32 %v1796, %v1804
          %v1813 = vadd.f32 %v1797, %v1805
          %1814 = vst [vmem:[%s404] sm:$0xff] %v1806
          %1815 = vst [vmem:[%s404 + $0x8] sm:$0xff] %v1807
          %1816 = vst [vmem:[%s404 + $0x10] sm:$0xff] %v1808
          %1817 = vst [vmem:[%s404 + $0x18] sm:$0xff] %v1809
          %1818 = vst [vmem:[%s404 + $0x20] sm:$0xff] %v1810
          %1819 = vst [vmem:[%s404 + $0x28] sm:$0xff] %v1811
          %1820 = vst [vmem:[%s404 + $0x30] sm:$0xff] %v1812
          %1821 = vst [vmem:[%s404 + $0x38] sm:$0xff] %v1813
        $region72: #{tpu_custom_call.1} parent=47 // pred_fallthru
          _
        %s1822 = sand.u32 %s216, 1
        %s1823 = scalar_lea.sflag [#allocation9], %s1822
        %s1824 = sand.u32 %s216, 1
        %s1825 = smul.addr %s1824, 64
        %s1826 = scalar_lea.vmem [#allocation15], %s1825
        // Predicated region
        $region73: #{tpu_custom_call.1} parent=47 // pred_check
          %p1827 = pneg %p226
        $region74: #{tpu_custom_call.1} parent=47 // pred_check_branch
          %1829 = sbr.rel (%p1827) target = $region76
        $region75: #{tpu_custom_call.1} parent=47 // pred_region
          %s1831 = ssub.s32 1024, 1024
          %1832 = vsyncadd %s1823, %s1831
          %s1833 = smul.addr %s34, 8
          %s1834 = smul.addr %s1833, 128
          %s1835 = scalar_lea.hbm %s7, %s1834
          %s1836 = sshll.u32 %s1826, 4
          %s1837 = int_to_ptr.vmem [resolvable:$true] %s1836
          %1842 = dma.vmem_to_hbm [thread:$0]  %s1837, 1024, %s1835, %s1823, 256, 256, 16
        $region76: #{tpu_custom_call.1} parent=47 // pred_fallthru
          _
      $region48: #{tpu_custom_call.1} parent=5 // pred_fallthru
        _
      %p1843 = scmp.le.s32.totalorder 2, %s25
      // Predicated region
      $region77: #{tpu_custom_call.1} parent=5 // pred_check
        %p1844 = pneg %p1843
      $region78: #{tpu_custom_call.1} parent=5 // pred_check_branch
        %1846 = sbr.rel (%p1844) target = $region80
      $region79: #{tpu_custom_call.1} parent=5 // pred_region
        %s1847 = ssub.s32 %s25, 2
        // Predicated region
        $region81: #{tpu_custom_call.1} parent=79 // pred_check
          %p1848 = pneg %p232
        $region82: #{tpu_custom_call.1} parent=79 // pred_check_branch
          %1850 = sbr.rel (%p1848) target = $region84
        $region83: #{tpu_custom_call.1} parent=79 // pred_region
          %s1851 = sand.u32 %s217, 1
          %s1852 = scalar_lea.sflag [#allocation9], %s1851
          %s1853 = sand.u32 %s217, 1
          %s1854 = smul.addr %s1853, 64
          %s1855 = scalar_lea.vmem [#allocation15], %s1854
          %1856 = dma.done %s1852, 1024
        $region84: #{tpu_custom_call.1} parent=79 // pred_fallthru
          _
      $region80: #{tpu_custom_call.1} parent=5 // pred_fallthru
        _
    $region6: #{tpu_custom_call.1} parent=1 // loop_footer
      %s29 = sadd.s32 1, %s25
    $region7: #{tpu_custom_call.1} parent=1 // loop_footer_branch
      %24 = sbr.rel target = $region3
    $region8: #{tpu_custom_call.1} parent=1 // loop_exit
      _
    %1857 = vsyncpa [#allocation8], 1
    %s1858 = scalar_lea.sflag [#allocation8], 1
    %1859 = vsyncpa %s1858, 1
    %1860 = vsyncpa [#allocation11], 1
    %s1861 = scalar_lea.sflag [#allocation11], 1
    %1862 = vsyncpa %s1861, 1
    %1863 = vsyncpa [#allocation14], 1
    %1864 = vsyncpa [#allocation9], 1
    %s1865 = scalar_lea.sflag [#allocation9], 1
    %1866 = vsyncpa %s1865, 1

</llo_original>
